<compile_context>
chip_gen: v7x
topology: tpu7x:2x2x1
jax: 0.10.0
libtpu: 0.0.40
codegen_flags: <defaults>
</compile_context>

<pallas_src>
import jax
import jax.numpy as jnp
import numpy as np
from jax import lax
from jax.experimental import pallas as pl
from jax.experimental.pallas import tpu as pltpu

# ---- small, BERT-shaped config ------------------------------------------------
BATCH = 2
SEQ = 8
HIDDEN = 32
NUM_HEADS = 4
HEAD_DIM = HIDDEN // NUM_HEADS
INTERMEDIATE = 4 * HIDDEN
NUM_LAYERS = 2
VOCAB = 100
MAX_POS = 16
TYPE_VOCAB = 2
LN_EPS = 1e-12


def _layer_norm(x, g, b, eps=LN_EPS):
    # x: (R, H) f32, g/b: (1, H) f32
    mu = jnp.mean(x, axis=-1, keepdims=True)
    var = jnp.mean((x - mu) * (x - mu), axis=-1, keepdims=True)
    return (x - mu) * lax.rsqrt(var + eps) * g + b


def bert_layer_kernel(
    x_ref,       # (S, H)    f32  embedded tokens for batch block b (pre-LayerNorm)
    neg_ref,     # (1, S)    f32  additive key mask for batch block b
    embg_ref,    # (1, H)    f32  embedding LN gamma
    embb_ref,    # (1, H)    f32  embedding LN beta
    wqkv_ref,    # (H, 3H)   bf16 fused QKV, per-head [q|k|v] lanes, q pre-scaled
    bqkv_ref,    # (1, 3H)   f32
    wo_ref,      # (H, H)    bf16 output projection (standard head-major rows)
    bo_ref,      # (1, H)    f32
    ln1g_ref, ln1b_ref,   # (1, H)
    w1_ref,      # (H, I)    bf16
    b1_ref,      # (1, I)    f32
    w2_ref,      # (I, H)    bf16
    b2_ref,      # (1, H)    f32
    ln2g_ref, ln2b_ref,   # (1, H)
    out_ref,     # (1, 1, H) f32  L2-normalized CLS embedding for batch block b
    x_sc,        # (S, H)    f32  VMEM scratch: hidden state carried across layers
    qkv_sc,      # (NH, S, 3HD) f32 VMEM scratch: head-major qkv
    ctx_sc,      # (S, H)    f32  VMEM scratch: lane-ordered attention context
):
    f32 = jnp.float32
    bf16 = jnp.bfloat16

    S, H = x_sc.shape
    NH, _, THD = qkv_sc.shape
    HD = THD // 3
    l = pl.program_id(1)
    n_layers = pl.num_programs(1)

    # ---- embedding LayerNorm once per batch block (layer grid index 0) ----
    @pl.when(l == 0)
    def _():
        x_sc[...] = _layer_norm(x_ref[...], embg_ref[...], embb_ref[...])

    x = x_sc[...]                                              # (S, H) f32

    # ---- fused QKV projection: one lane-dense 2D matmul (N = 3H) ----
    qkv = jnp.dot(x.astype(bf16), wqkv_ref[...],
                  preferred_element_type=f32) + bqkv_ref[...]  # (S, 3H) f32

    # head-major relayout via static scratch writes (per-head contiguous lanes)
    for h in range(NH):
        qkv_sc[h] = qkv[:, h * THD:(h + 1) * THD]              # (S, 3HD)
    qkv_hm = qkv_sc[...]                                       # (NH, S, 3HD)
    q = qkv_hm[:, :, 0:HD].astype(bf16)                        # 1/sqrt(HD) folded in Wq
    k = qkv_hm[:, :, HD:2 * HD].astype(bf16)
    v = qkv_hm[:, :, 2 * HD:3 * HD].astype(bf16)

    # ---- attention: single dot_general batched over heads ----
    s = lax.dot_general(q, k, (((2,), (2,)), ((0,), (0,))),
                        preferred_element_type=f32)            # (NH, S, S)
    s = s + neg_ref[...]                                       # (1, S) key-mask broadcast
    s = s - jnp.max(s, axis=-1, keepdims=True)
    p = jnp.exp(s)
    p = p * pl.reciprocal(jnp.sum(p, axis=-1, keepdims=True), approx=True)
    ctx = lax.dot_general(p.astype(bf16), v, (((2,), (1,)), ((0,), (0,))),
                          preferred_element_type=f32)          # (NH, S, HD)

    # ---- heads back to lanes via scratch writes, then ONE (S,H)x(H,H) matmul ----
    for h in range(NH):
        ctx_sc[:, h * HD:(h + 1) * HD] = ctx[h]
    attn = jnp.dot(ctx_sc[...].astype(bf16), wo_ref[...],
                   preferred_element_type=f32) + bo_ref[...]   # (S, H)
    x = _layer_norm(x + attn, ln1g_ref[...], ln1b_ref[...])

    # ---- feed-forward (GELU, tanh approximation) ----
    h1 = jnp.dot(x.astype(bf16), w1_ref[...],
                 preferred_element_type=f32) + b1_ref[...]     # (S, I)
    h1 = jax.nn.gelu(h1, approximate=True)
    f2 = jnp.dot(h1.astype(bf16), w2_ref[...],
                 preferred_element_type=f32) + b2_ref[...]     # (S, H)
    x = _layer_norm(x + f2, ln2g_ref[...], ln2b_ref[...])
    x_sc[...] = x

    # ---- CLS + L2 normalize (F.normalize p=2, dim=1, eps=1e-12) at last layer ----
    @pl.when(l == n_layers - 1)
    def _():
        cls = x[0:1, :]                                        # CLS row of this block
        nrm = jnp.sqrt(jnp.sum(cls * cls, axis=-1, keepdims=True))
        out_ref[0] = cls / jnp.maximum(nrm, 1e-12)


def init_params(key):
    ks = jax.random.split(key, 32)
    std = 0.02
    p = {}
    p["word_emb"] = std * jax.random.normal(ks[0], (VOCAB, HIDDEN), jnp.float32)
    p["pos_emb"] = std * jax.random.normal(ks[1], (MAX_POS, HIDDEN), jnp.float32)
    p["type_emb"] = std * jax.random.normal(ks[2], (TYPE_VOCAB, HIDDEN), jnp.float32)
    p["emb_g"] = jnp.ones((1, HIDDEN), jnp.float32)
    p["emb_b"] = jnp.zeros((1, HIDDEN), jnp.float32)

    def w(k, shape):
        return std * jax.random.normal(k, shape, jnp.float32)

    L, H, I = NUM_LAYERS, HIDDEN, INTERMEDIATE
    p["wq"], p["wk"], p["wv"], p["wo"] = (w(ks[3 + i], (L, H, H)) for i in range(4))
    p["bq"] = jnp.zeros((L, 1, H), jnp.float32)
    p["bk"] = jnp.zeros((L, 1, H), jnp.float32)
    p["bv"] = jnp.zeros((L, 1, H), jnp.float32)
    p["bo"] = jnp.zeros((L, 1, H), jnp.float32)
    p["ln1g"] = jnp.ones((L, 1, H), jnp.float32)
    p["ln1b"] = jnp.zeros((L, 1, H), jnp.float32)
    p["w1"] = w(ks[7], (L, H, I))
    p["b1"] = jnp.zeros((L, 1, I), jnp.float32)
    p["w2"] = w(ks[8], (L, I, H))
    p["b2"] = jnp.zeros((L, 1, H), jnp.float32)
    p["ln2g"] = jnp.ones((L, 1, H), jnp.float32)
    p["ln2b"] = jnp.zeros((L, 1, H), jnp.float32)
    return p


@jax.jit
def bert_forward(token_ids, attn_mask, params):
    """token_ids: (B, S) int32; attn_mask: (B, S) float32 -> (B, H) normalized CLS."""
    B, S = token_ids.shape
    L, H, I = NUM_LAYERS, HIDDEN, INTERMEDIATE
    NH, HD = NUM_HEADS, HEAD_DIM
    bf16 = jnp.bfloat16

    # embedding gather (glue, plain JAX)
    x_emb = (params["word_emb"][token_ids]
             + params["pos_emb"][:S][None, :, :]
             + params["type_emb"][0][None, None, :]).astype(jnp.float32)   # (B, S, H)

    # additive key mask, (B, 1, S): broadcast over queries/heads inside the kernel
    neg = ((1.0 - attn_mask) * -1e9).astype(jnp.float32)[:, None, :]

    # ---- host-side weight repacking: fused QKV (per-head [q|k|v] lanes), bf16 ----
    inv = 1.0 / float(np.sqrt(HD))

    def pack_qkv(wq, wk, wv):   # 3 x (L, H, H) -> (L, H, 3H), lanes [h][q|k|v][hd]
        sp = lambda w: w.reshape(L, H, NH, HD)
        return jnp.stack([sp(wq), sp(wk), sp(wv)], axis=3).reshape(L, H, 3 * H)

    def pack_qkv_b(bq, bk, bv):  # 3 x (L, 1, H) -> (L, 1, 3H)
        sp = lambda b: b.reshape(L, 1, NH, HD)
        return jnp.stack([sp(bq), sp(bk), sp(bv)], axis=3).reshape(L, 1, 3 * H)

    wqkv = pack_qkv(params["wq"] * inv, params["wk"], params["wv"]).astype(bf16)
    bqkv = pack_qkv_b(params["bq"] * inv, params["bk"], params["bv"])      # f32
    wo = params["wo"].astype(bf16)          # (L, H, H) — ctx lanes already head-major
    w1 = params["w1"].astype(bf16)
    w2 = params["w2"].astype(bf16)

    const2 = lambda b, l: (0, 0)            # per-call constants
    per_b = lambda b, l: (b, 0, 0)          # per-batch blocks
    per_l = lambda b, l: (l, 0, 0)          # per-layer (streamed) weight blocks

    in_specs = [
        pl.BlockSpec((None, S, H), per_b),          # x_emb     (B, S, H)
        pl.BlockSpec((None, 1, S), per_b),          # neg mask  (B, 1, S)
        pl.BlockSpec((1, H), const2),               # emb LN gamma
        pl.BlockSpec((1, H), const2),               # emb LN beta
        pl.BlockSpec((None, H, 3 * H), per_l),      # wqkv
        pl.BlockSpec((None, 1, 3 * H), per_l),      # bqkv
        pl.BlockSpec((None, H, H), per_l),          # wo
        pl.BlockSpec((None, 1, H), per_l),          # bo
        pl.BlockSpec((None, 1, H), per_l),          # ln1g
        pl.BlockSpec((None, 1, H), per_l),          # ln1b
        pl.BlockSpec((None, H, I), per_l),          # w1
        pl.BlockSpec((None, 1, I), per_l),          # b1
        pl.BlockSpec((None, I, H), per_l),          # w2
        pl.BlockSpec((None, 1, H), per_l),          # b2
        pl.BlockSpec((None, 1, H), per_l),          # ln2g
        pl.BlockSpec((None, 1, H), per_l),          # ln2b
    ]
    out_spec = pl.BlockSpec((1, 1, H), per_b)

    scratch = [
        pltpu.VMEM((S, H), jnp.float32),            # hidden state across layer axis
        pltpu.VMEM((NH, S, 3 * HD), jnp.float32),   # head-major qkv
        pltpu.VMEM((S, H), jnp.float32),            # lane-ordered attention context
    ]

    flops = B * L * (2 * S * H * 3 * H        # QKV projection
                     + 4 * NH * S * S * HD    # QK^T and PV
                     + 2 * S * H * H          # output projection
                     + 4 * S * H * I)         # FFN
    transc = B * L * (NH * S * S + S * I)
    w_bytes = 2 * B * L * (H * 3 * H + H * H + 2 * H * I)        # bf16 weights (per-b refetch)
    p_bytes = 4 * B * (L * (3 * H + 6 * H + I) + 2 * H)          # f32 biases + LN params
    a_bytes = 4 * (B * S * H + B * S + B * H)                    # activations + mask + out
    cost = pl.CostEstimate(flops=int(flops), transcendentals=int(transc),
                           bytes_accessed=int(w_bytes + p_bytes + a_bytes))

    out = pl.pallas_call(
        bert_layer_kernel,
        out_shape=jax.ShapeDtypeStruct((B, 1, H), jnp.float32),
        grid_spec=pltpu.PrefetchScalarGridSpec(
            num_scalar_prefetch=0,
            grid=(B, L),                     # batch blocks parallel, layers streamed
            in_specs=in_specs,
            out_specs=out_spec,
            scratch_shapes=scratch,
        ),
        compiler_params=pltpu.CompilerParams(
            dimension_semantics=("parallel", "arbitrary")),
        cost_estimate=cost,
    )(
        x_emb, neg,
        params["emb_g"], params["emb_b"],
        wqkv, bqkv, wo, params["bo"],
        params["ln1g"], params["ln1b"],
        w1, params["b1"], w2, params["b2"],
        params["ln2g"], params["ln2b"],
    )
    return out.reshape(B, H)


# ---- pure-JAX reference (mirrors kernel precision: bf16 matmuls, f32 accumulate) ----
def bert_forward_ref(token_ids, attn_mask, p):
    bf16, f32 = jnp.bfloat16, jnp.float32
    B, S = token_ids.shape
    H, NH, HD = HIDDEN, NUM_HEADS, HEAD_DIM
    x = (p["word_emb"][token_ids] + p["pos_emb"][:S][None] + p["type_emb"][0][None, None])

    def ln(x, g, b):
        mu = x.mean(-1, keepdims=True)
        var = ((x - mu) ** 2).mean(-1, keepdims=True)
        return (x - mu) * lax.rsqrt(var + LN_EPS) * g + b

    def mm(a, w):
        return jnp.einsum("...ij,jk->...ik", a.astype(bf16), w.astype(bf16),
                          preferred_element_type=f32)

    x = ln(x, p["emb_g"][0], p["emb_b"][0])
    neg = (1.0 - attn_mask)[:, None, None, :] * -1e9
    inv = 1.0 / np.sqrt(HD)
    for l in range(NUM_LAYERS):
        q = mm(x, p["wq"][l] * inv) + p["bq"][l] * inv
        k = mm(x, p["wk"][l]) + p["bk"][l]
        v = mm(x, p["wv"][l]) + p["bv"][l]
        split = lambda t: t.reshape(B, S, NH, HD).transpose(0, 2, 1, 3)
        q, k, v = split(q), split(k), split(v)
        sc = jnp.einsum("bhqd,bhkd->bhqk", q.astype(bf16), k.astype(bf16),
                        preferred_element_type=f32) + neg
        pr = jax.nn.softmax(sc, axis=-1)
        ctx = jnp.einsum("bhqk,bhkd->bhqd", pr.astype(bf16), v.astype(bf16),
                         preferred_element_type=f32)
        ctx = ctx.transpose(0, 2, 1, 3).reshape(B, S, HIDDEN)
        x = ln(x + mm(ctx, p["wo"][l]) + p["bo"][l], p["ln1g"][l], p["ln1b"][l])
        h = jax.nn.gelu(mm(x, p["w1"][l]) + p["b1"][l], approximate=True)
        x = ln(x + mm(h, p["w2"][l]) + p["b2"][l], p["ln2g"][l], p["ln2b"][l])
    cls = x[:, 0, :]
    return cls / jnp.maximum(jnp.linalg.norm(cls, axis=1, keepdims=True), 1e-12)


if __name__ == "__main__":
    key = jax.random.PRNGKey(0)
    k_tok, k_param = jax.random.split(key)

    token_ids = jax.random.randint(k_tok, (BATCH, SEQ), 0, VOCAB, dtype=jnp.int32)
    # exercise the padding/mask path: last two tokens of batch 1 are padding
    attn_mask = jnp.ones((BATCH, SEQ), jnp.float32).at[1, SEQ - 2:].set(0.0)
    params = init_params(k_param)

    out = jax.block_until_ready(bert_forward(token_ids, attn_mask, params))

    ref = bert_forward_ref(token_ids, attn_mask, params)
    np.testing.assert_allclose(np.asarray(out), np.asarray(ref), rtol=2e-2, atol=2e-2)
    assert out.shape == (BATCH, HIDDEN)

    print("KERNEL_OK")
</pallas_src>

<mosaic_0001>
module attributes {stable_mosaic.version = 11 : i64} {
  func.func @bert_layer_kernel(%arg0: i32, %arg1: i32, %arg2: memref<1x8x32xf32, #tpu.memory_space<vmem>>, %arg3: memref<1x1x8xf32, #tpu.memory_space<vmem>>, %arg4: memref<1x32xf32, #tpu.memory_space<vmem>>, %arg5: memref<1x32xf32, #tpu.memory_space<vmem>>, %arg6: memref<1x32x96xbf16, #tpu.memory_space<vmem>>, %arg7: memref<1x1x96xf32, #tpu.memory_space<vmem>>, %arg8: memref<1x32x32xbf16, #tpu.memory_space<vmem>>, %arg9: memref<1x1x32xf32, #tpu.memory_space<vmem>>, %arg10: memref<1x1x32xf32, #tpu.memory_space<vmem>>, %arg11: memref<1x1x32xf32, #tpu.memory_space<vmem>>, %arg12: memref<1x32x128xbf16, #tpu.memory_space<vmem>>, %arg13: memref<1x1x128xf32, #tpu.memory_space<vmem>>, %arg14: memref<1x128x32xbf16, #tpu.memory_space<vmem>>, %arg15: memref<1x1x32xf32, #tpu.memory_space<vmem>>, %arg16: memref<1x1x32xf32, #tpu.memory_space<vmem>>, %arg17: memref<1x1x32xf32, #tpu.memory_space<vmem>>, %arg18: memref<1x1x32xf32, #tpu.memory_space<vmem>>, %arg19: memref<8x32xf32, #tpu.memory_space<vmem>>, %arg20: memref<4x8x24xf32, #tpu.memory_space<vmem>>, %arg21: memref<8x32xf32, #tpu.memory_space<vmem>>) attributes {dimension_semantics = [#tpu.dimension_semantics<parallel>, #tpu.dimension_semantics<arbitrary>], iteration_bounds = array<i64: 2, 2>, scalar_prefetch = 0 : i64, scratch_operands = 3 : i64, tpu.core_type = #tpu.core_type<tc>, window_params = [{transform_indices = @transform_0, window_bounds = array<i64: 1, 8, 32>}, {transform_indices = @transform_1, window_bounds = array<i64: 1, 1, 8>}, {pipeline_mode = #tpu.pipeline_mode<synchronous>, transform_indices = @transform_2, window_bounds = array<i64: 1, 32>}, {pipeline_mode = #tpu.pipeline_mode<synchronous>, transform_indices = @transform_3, window_bounds = array<i64: 1, 32>}, {transform_indices = @transform_4, window_bounds = array<i64: 1, 32, 96>}, {transform_indices = @transform_5, window_bounds = array<i64: 1, 1, 96>}, {transform_indices = @transform_6, window_bounds = array<i64: 1, 32, 32>}, {transform_indices = @transform_7, window_bounds = array<i64: 1, 1, 32>}, {transform_indices = @transform_8, window_bounds = array<i64: 1, 1, 32>}, {transform_indices = @transform_9, window_bounds = array<i64: 1, 1, 32>}, {transform_indices = @transform_10, window_bounds = array<i64: 1, 32, 128>}, {transform_indices = @transform_11, window_bounds = array<i64: 1, 1, 128>}, {transform_indices = @transform_12, window_bounds = array<i64: 1, 128, 32>}, {transform_indices = @transform_13, window_bounds = array<i64: 1, 1, 32>}, {transform_indices = @transform_14, window_bounds = array<i64: 1, 1, 32>}, {transform_indices = @transform_15, window_bounds = array<i64: 1, 1, 32>}, {transform_indices = @transform_16, window_bounds = array<i64: 1, 1, 32>}]} {
    %c0_i32 = arith.constant 0 : i32
    %0 = arith.cmpi eq, %arg1, %c0_i32 : i32
    %1 = arith.extui %0 : i1 to i32
    %c0_i32_0 = arith.constant 0 : i32
    %2 = arith.cmpi ne, %1, %c0_i32_0 : i32
    scf.if %2 {
      %c0_84 = arith.constant 0 : index
      %c0_85 = arith.constant 0 : index
      %c0_86 = arith.constant 0 : index
      %165 = vector.load %arg2[%c0_84, %c0_85, %c0_86] : memref<1x8x32xf32, #tpu.memory_space<vmem>>, vector<1x8x32xf32>
      %166 = vector.shape_cast %165 : vector<1x8x32xf32> to vector<8x32xf32>
      %c0_87 = arith.constant 0 : index
      %c0_88 = arith.constant 0 : index
      %167 = vector.load %arg4[%c0_87, %c0_88] : memref<1x32xf32, #tpu.memory_space<vmem>>, vector<1x32xf32>
      %c0_89 = arith.constant 0 : index
      %c0_90 = arith.constant 0 : index
      %168 = vector.load %arg5[%c0_89, %c0_90] : memref<1x32xf32, #tpu.memory_space<vmem>>, vector<1x32xf32>
      %cst_91 = arith.constant dense<0.000000e+00> : vector<8xf32>
      %169 = vector.multi_reduction <add>, %166, %cst_91 [1] : vector<8x32xf32> to vector<8xf32>
      %170 = vector.shape_cast %169 : vector<8xf32> to vector<8x1xf32>
      %cst_92 = arith.constant 3.200000e+01 : f32
      %171 = vector.broadcast %cst_92 : f32 to vector<8x1xf32>
      %172 = arith.divf %170, %171 : vector<8x1xf32>
      %173 = vector.broadcast %172 : vector<8x1xf32> to vector<8x32xf32>
      %174 = arith.subf %166, %173 : vector<8x32xf32>
      %175 = vector.broadcast %172 : vector<8x1xf32> to vector<8x32xf32>
      %176 = arith.subf %166, %175 : vector<8x32xf32>
      %177 = arith.mulf %174, %176 : vector<8x32xf32>
      %cst_93 = arith.constant dense<0.000000e+00> : vector<8xf32>
      %178 = vector.multi_reduction <add>, %177, %cst_93 [1] : vector<8x32xf32> to vector<8xf32>
      %179 = vector.shape_cast %178 : vector<8xf32> to vector<8x1xf32>
      %cst_94 = arith.constant 3.200000e+01 : f32
      %180 = vector.broadcast %cst_94 : f32 to vector<8x1xf32>
      %181 = arith.divf %179, %180 : vector<8x1xf32>
      %182 = vector.broadcast %172 : vector<8x1xf32> to vector<8x32xf32>
      %183 = arith.subf %166, %182 : vector<8x32xf32>
      %cst_95 = arith.constant 9.99999996E-13 : f32
      %184 = vector.broadcast %cst_95 : f32 to vector<8x1xf32>
      %185 = arith.addf %181, %184 : vector<8x1xf32>
      %186 = math.rsqrt %185 : vector<8x1xf32>
      %187 = vector.broadcast %186 : vector<8x1xf32> to vector<8x32xf32>
      %188 = arith.mulf %183, %187 : vector<8x32xf32>
      %189 = vector.broadcast %167 : vector<1x32xf32> to vector<8x32xf32>
      %190 = arith.mulf %188, %189 : vector<8x32xf32>
      %191 = vector.broadcast %168 : vector<1x32xf32> to vector<8x32xf32>
      %192 = arith.addf %190, %191 : vector<8x32xf32>
      %c0_96 = arith.constant 0 : index
      %c0_97 = arith.constant 0 : index
      %193 = vector.load %arg19[%c0_96, %c0_97] : memref<8x32xf32, #tpu.memory_space<vmem>>, vector<8x32xf32>
      tpu.vector_store %arg19[%c0_96, %c0_97], %192 {strides = array<i32>} : memref<8x32xf32, #tpu.memory_space<vmem>>, vector<8x32xf32>,
    } else {
    }
    %c0 = arith.constant 0 : index
    %c0_1 = arith.constant 0 : index
    %3 = vector.load %arg19[%c0, %c0_1] : memref<8x32xf32, #tpu.memory_space<vmem>>, vector<8x32xf32>
    %4 = arith.truncf %3 : vector<8x32xf32> to vector<8x32xbf16>
    %c0_2 = arith.constant 0 : index
    %c0_3 = arith.constant 0 : index
    %c0_4 = arith.constant 0 : index
    %5 = vector.load %arg6[%c0_2, %c0_3, %c0_4] : memref<1x32x96xbf16, #tpu.memory_space<vmem>>, vector<1x32x96xbf16>
    %6 = vector.shape_cast %5 : vector<1x32x96xbf16> to vector<32x96xbf16>
    %cst = arith.constant dense<0.000000e+00> : vector<8x96xf32>
    %7 = tpu.matmul %4, %6, %cst {dimension_numbers = #tpu.dot_dimension_numbers<[1], [0], [0], [1], [0, 0, 1, 1], [], []>} : vector<8x32xbf16>, vector<32x96xbf16>, vector<8x96xf32> -> vector<8x96xf32>
    %c0_5 = arith.constant 0 : index
    %c0_6 = arith.constant 0 : index
    %c0_7 = arith.constant 0 : index
    %8 = vector.load %arg7[%c0_5, %c0_6, %c0_7] : memref<1x1x96xf32, #tpu.memory_space<vmem>>, vector<1x1x96xf32>
    %9 = vector.shape_cast %8 : vector<1x1x96xf32> to vector<1x96xf32>
    %10 = vector.broadcast %9 : vector<1x96xf32> to vector<8x96xf32>
    %11 = arith.addf %7, %10 : vector<8x96xf32>
    %12 = vector.extract_strided_slice %11 {offsets = [0, 0], sizes = [8, 24], strides = [1, 1]} : vector<8x96xf32> to vector<8x24xf32>
    %c0_8 = arith.constant 0 : index
    %c0_9 = arith.constant 0 : index
    %c0_10 = arith.constant 0 : index
    %13 = vector.load %arg20[%c0_8, %c0_9, %c0_10] : memref<4x8x24xf32, #tpu.memory_space<vmem>>, vector<1x8x24xf32>
    %14 = vector.shape_cast %13 : vector<1x8x24xf32> to vector<8x24xf32>
    %15 = vector.shape_cast %12 : vector<8x24xf32> to vector<1x8x24xf32>
    tpu.vector_store %arg20[%c0_8, %c0_9, %c0_10], %15 {strides = array<i32>} : memref<4x8x24xf32, #tpu.memory_space<vmem>>, vector<1x8x24xf32>,
    %16 = vector.extract_strided_slice %11 {offsets = [0, 24], sizes = [8, 24], strides = [1, 1]} : vector<8x96xf32> to vector<8x24xf32>
    %c1 = arith.constant 1 : index
    %c0_11 = arith.constant 0 : index
    %c0_12 = arith.constant 0 : index
    %17 = vector.load %arg20[%c1, %c0_11, %c0_12] : memref<4x8x24xf32, #tpu.memory_space<vmem>>, vector<1x8x24xf32>
    %18 = vector.shape_cast %17 : vector<1x8x24xf32> to vector<8x24xf32>
    %19 = vector.shape_cast %16 : vector<8x24xf32> to vector<1x8x24xf32>
    tpu.vector_store %arg20[%c1, %c0_11, %c0_12], %19 {strides = array<i32>} : memref<4x8x24xf32, #tpu.memory_space<vmem>>, vector<1x8x24xf32>,
    %20 = vector.extract_strided_slice %11 {offsets = [0, 48], sizes = [8, 24], strides = [1, 1]} : vector<8x96xf32> to vector<8x24xf32>
    %c2 = arith.constant 2 : index
    %c0_13 = arith.constant 0 : index
    %c0_14 = arith.constant 0 : index
    %21 = vector.load %arg20[%c2, %c0_13, %c0_14] : memref<4x8x24xf32, #tpu.memory_space<vmem>>, vector<1x8x24xf32>
    %22 = vector.shape_cast %21 : vector<1x8x24xf32> to vector<8x24xf32>
    %23 = vector.shape_cast %20 : vector<8x24xf32> to vector<1x8x24xf32>
    tpu.vector_store %arg20[%c2, %c0_13, %c0_14], %23 {strides = array<i32>} : memref<4x8x24xf32, #tpu.memory_space<vmem>>, vector<1x8x24xf32>,
    %24 = vector.extract_strided_slice %11 {offsets = [0, 72], sizes = [8, 24], strides = [1, 1]} : vector<8x96xf32> to vector<8x24xf32>
    %c3 = arith.constant 3 : index
    %c0_15 = arith.constant 0 : index
    %c0_16 = arith.constant 0 : index
    %25 = vector.load %arg20[%c3, %c0_15, %c0_16] : memref<4x8x24xf32, #tpu.memory_space<vmem>>, vector<1x8x24xf32>
    %26 = vector.shape_cast %25 : vector<1x8x24xf32> to vector<8x24xf32>
    %27 = vector.shape_cast %24 : vector<8x24xf32> to vector<1x8x24xf32>
    tpu.vector_store %arg20[%c3, %c0_15, %c0_16], %27 {strides = array<i32>} : memref<4x8x24xf32, #tpu.memory_space<vmem>>, vector<1x8x24xf32>,
    %c0_17 = arith.constant 0 : index
    %c0_18 = arith.constant 0 : index
    %c0_19 = arith.constant 0 : index
    %28 = vector.load %arg20[%c0_17, %c0_18, %c0_19] : memref<4x8x24xf32, #tpu.memory_space<vmem>>, vector<4x8x24xf32>
    %29 = vector.extract_strided_slice %28 {offsets = [0, 0, 0], sizes = [4, 8, 8], strides = [1, 1, 1]} : vector<4x8x24xf32> to vector<4x8x8xf32>
    %30 = arith.truncf %29 : vector<4x8x8xf32> to vector<4x8x8xbf16>
    %31 = vector.extract_strided_slice %28 {offsets = [0, 0, 8], sizes = [4, 8, 8], strides = [1, 1, 1]} : vector<4x8x24xf32> to vector<4x8x8xf32>
    %32 = arith.truncf %31 : vector<4x8x8xf32> to vector<4x8x8xbf16>
    %33 = vector.extract_strided_slice %28 {offsets = [0, 0, 16], sizes = [4, 8, 8], strides = [1, 1, 1]} : vector<4x8x24xf32> to vector<4x8x8xf32>
    %34 = arith.truncf %33 : vector<4x8x8xf32> to vector<4x8x8xbf16>
    %cst_20 = arith.constant dense<0.000000e+00> : vector<4x8x8xf32>
    %35 = tpu.matmul %30, %32, %cst_20 {dimension_numbers = #tpu.dot_dimension_numbers<[2], [2], [1], [1], [0, 0, 0, 1, 1, 1], [0], [0]>} : vector<4x8x8xbf16>, vector<4x8x8xbf16>, vector<4x8x8xf32> -> vector<4x8x8xf32>
    %c0_21 = arith.constant 0 : index
    %c0_22 = arith.constant 0 : index
    %c0_23 = arith.constant 0 : index
    %36 = vector.load %arg3[%c0_21, %c0_22, %c0_23] : memref<1x1x8xf32, #tpu.memory_space<vmem>>, vector<1x1x8xf32>
    %37 = vector.shape_cast %36 : vector<1x1x8xf32> to vector<1x8xf32>
    %38 = vector.shape_cast %37 : vector<1x8xf32> to vector<1x1x8xf32>
    %39 = vector.broadcast %38 : vector<1x1x8xf32> to vector<4x8x8xf32>
    %40 = arith.addf %35, %39 : vector<4x8x8xf32>
    %cst_24 = arith.constant dense<0xFF800000> : vector<4x8xf32>
    %41 = vector.multi_reduction <maximumf>, %40, %cst_24 [2] : vector<4x8x8xf32> to vector<4x8xf32>
    %42 = vector.shape_cast %41 : vector<4x8xf32> to vector<4x8x1xf32>
    %43 = vector.broadcast %42 : vector<4x8x1xf32> to vector<4x8x8xf32>
    %44 = arith.subf %40, %43 : vector<4x8x8xf32>
    %45 = math.exp %44 : vector<4x8x8xf32>
    %cst_25 = arith.constant dense<0.000000e+00> : vector<4x8xf32>
    %46 = vector.multi_reduction <add>, %45, %cst_25 [2] : vector<4x8x8xf32> to vector<4x8xf32>
    %47 = vector.shape_cast %46 : vector<4x8xf32> to vector<4x8x1xf32>
    %48 = tpu.reciprocal %47 {approx = true} : vector<4x8x1xf32> -> vector<4x8x1xf32>
    %49 = vector.broadcast %48 : vector<4x8x1xf32> to vector<4x8x8xf32>
    %50 = arith.mulf %45, %49 : vector<4x8x8xf32>
    %51 = arith.truncf %50 : vector<4x8x8xf32> to vector<4x8x8xbf16>
    %cst_26 = arith.constant dense<0.000000e+00> : vector<4x8x8xf32>
    %52 = tpu.matmul %51, %34, %cst_26 {dimension_numbers = #tpu.dot_dimension_numbers<[2], [1], [1], [2], [0, 0, 0, 1, 1, 2], [0], [0]>} : vector<4x8x8xbf16>, vector<4x8x8xbf16>, vector<4x8x8xf32> -> vector<4x8x8xf32>
    %53 = vector.extract_strided_slice %52 {offsets = [0, 0, 0], sizes = [1, 8, 8], strides = [1, 1, 1]} : vector<4x8x8xf32> to vector<1x8x8xf32>
    %54 = vector.shape_cast %53 : vector<1x8x8xf32> to vector<8x8xf32>
    %c0_27 = arith.constant 0 : index
    %c0_28 = arith.constant 0 : index
    %55 = vector.load %arg21[%c0_27, %c0_28] : memref<8x32xf32, #tpu.memory_space<vmem>>, vector<8x8xf32>
    tpu.vector_store %arg21[%c0_27, %c0_28], %54 {strides = array<i32>} : memref<8x32xf32, #tpu.memory_space<vmem>>, vector<8x8xf32>,
    %56 = vector.extract_strided_slice %52 {offsets = [1, 0, 0], sizes = [1, 8, 8], strides = [1, 1, 1]} : vector<4x8x8xf32> to vector<1x8x8xf32>
    %57 = vector.shape_cast %56 : vector<1x8x8xf32> to vector<8x8xf32>
    %c0_29 = arith.constant 0 : index
    %c8 = arith.constant 8 : index
    %58 = vector.load %arg21[%c0_29, %c8] : memref<8x32xf32, #tpu.memory_space<vmem>>, vector<8x8xf32>
    tpu.vector_store %arg21[%c0_29, %c8], %57 {strides = array<i32>} : memref<8x32xf32, #tpu.memory_space<vmem>>, vector<8x8xf32>,
    %59 = vector.extract_strided_slice %52 {offsets = [2, 0, 0], sizes = [1, 8, 8], strides = [1, 1, 1]} : vector<4x8x8xf32> to vector<1x8x8xf32>
    %60 = vector.shape_cast %59 : vector<1x8x8xf32> to vector<8x8xf32>
    %c0_30 = arith.constant 0 : index
    %c16 = arith.constant 16 : index
    %61 = vector.load %arg21[%c0_30, %c16] : memref<8x32xf32, #tpu.memory_space<vmem>>, vector<8x8xf32>
    tpu.vector_store %arg21[%c0_30, %c16], %60 {strides = array<i32>} : memref<8x32xf32, #tpu.memory_space<vmem>>, vector<8x8xf32>,
    %62 = vector.extract_strided_slice %52 {offsets = [3, 0, 0], sizes = [1, 8, 8], strides = [1, 1, 1]} : vector<4x8x8xf32> to vector<1x8x8xf32>
    %63 = vector.shape_cast %62 : vector<1x8x8xf32> to vector<8x8xf32>
    %c0_31 = arith.constant 0 : index
    %c24 = arith.constant 24 : index
    %64 = vector.load %arg21[%c0_31, %c24] : memref<8x32xf32, #tpu.memory_space<vmem>>, vector<8x8xf32>
    tpu.vector_store %arg21[%c0_31, %c24], %63 {strides = array<i32>} : memref<8x32xf32, #tpu.memory_space<vmem>>, vector<8x8xf32>,
    %c0_32 = arith.constant 0 : index
    %c0_33 = arith.constant 0 : index
    %65 = vector.load %arg21[%c0_32, %c0_33] : memref<8x32xf32, #tpu.memory_space<vmem>>, vector<8x32xf32>
    %66 = arith.truncf %65 : vector<8x32xf32> to vector<8x32xbf16>
    %c0_34 = arith.constant 0 : index
    %c0_35 = arith.constant 0 : index
    %c0_36 = arith.constant 0 : index
    %67 = vector.load %arg8[%c0_34, %c0_35, %c0_36] : memref<1x32x32xbf16, #tpu.memory_space<vmem>>, vector<1x32x32xbf16>
    %68 = vector.shape_cast %67 : vector<1x32x32xbf16> to vector<32x32xbf16>
    %cst_37 = arith.constant dense<0.000000e+00> : vector<8x32xf32>
    %69 = tpu.matmul %66, %68, %cst_37 {dimension_numbers = #tpu.dot_dimension_numbers<[1], [0], [0], [1], [0, 0, 1, 1], [], []>} : vector<8x32xbf16>, vector<32x32xbf16>, vector<8x32xf32> -> vector<8x32xf32>
    %c0_38 = arith.constant 0 : index
    %c0_39 = arith.constant 0 : index
    %c0_40 = arith.constant 0 : index
    %70 = vector.load %arg9[%c0_38, %c0_39, %c0_40] : memref<1x1x32xf32, #tpu.memory_space<vmem>>, vector<1x1x32xf32>
    %71 = vector.shape_cast %70 : vector<1x1x32xf32> to vector<1x32xf32>
    %72 = vector.broadcast %71 : vector<1x32xf32> to vector<8x32xf32>
    %73 = arith.addf %69, %72 : vector<8x32xf32>
    %74 = arith.addf %3, %73 : vector<8x32xf32>
    %c0_41 = arith.constant 0 : index
    %c0_42 = arith.constant 0 : index
    %c0_43 = arith.constant 0 : index
    %75 = vector.load %arg10[%c0_41, %c0_42, %c0_43] : memref<1x1x32xf32, #tpu.memory_space<vmem>>, vector<1x1x32xf32>
    %76 = vector.shape_cast %75 : vector<1x1x32xf32> to vector<1x32xf32>
    %c0_44 = arith.constant 0 : index
    %c0_45 = arith.constant 0 : index
    %c0_46 = arith.constant 0 : index
    %77 = vector.load %arg11[%c0_44, %c0_45, %c0_46] : memref<1x1x32xf32, #tpu.memory_space<vmem>>, vector<1x1x32xf32>
    %78 = vector.shape_cast %77 : vector<1x1x32xf32> to vector<1x32xf32>
    %cst_47 = arith.constant dense<0.000000e+00> : vector<8xf32>
    %79 = vector.multi_reduction <add>, %74, %cst_47 [1] : vector<8x32xf32> to vector<8xf32>
    %80 = vector.shape_cast %79 : vector<8xf32> to vector<8x1xf32>
    %cst_48 = arith.constant 3.200000e+01 : f32
    %81 = vector.broadcast %cst_48 : f32 to vector<8x1xf32>
    %82 = arith.divf %80, %81 : vector<8x1xf32>
    %83 = vector.broadcast %82 : vector<8x1xf32> to vector<8x32xf32>
    %84 = arith.subf %74, %83 : vector<8x32xf32>
    %85 = vector.broadcast %82 : vector<8x1xf32> to vector<8x32xf32>
    %86 = arith.subf %74, %85 : vector<8x32xf32>
    %87 = arith.mulf %84, %86 : vector<8x32xf32>
    %cst_49 = arith.constant dense<0.000000e+00> : vector<8xf32>
    %88 = vector.multi_reduction <add>, %87, %cst_49 [1] : vector<8x32xf32> to vector<8xf32>
    %89 = vector.shape_cast %88 : vector<8xf32> to vector<8x1xf32>
    %cst_50 = arith.constant 3.200000e+01 : f32
    %90 = vector.broadcast %cst_50 : f32 to vector<8x1xf32>
    %91 = arith.divf %89, %90 : vector<8x1xf32>
    %92 = vector.broadcast %82 : vector<8x1xf32> to vector<8x32xf32>
    %93 = arith.subf %74, %92 : vector<8x32xf32>
    %cst_51 = arith.constant 9.99999996E-13 : f32
    %94 = vector.broadcast %cst_51 : f32 to vector<8x1xf32>
    %95 = arith.addf %91, %94 : vector<8x1xf32>
    %96 = math.rsqrt %95 : vector<8x1xf32>
    %97 = vector.broadcast %96 : vector<8x1xf32> to vector<8x32xf32>
    %98 = arith.mulf %93, %97 : vector<8x32xf32>
    %99 = vector.broadcast %76 : vector<1x32xf32> to vector<8x32xf32>
    %100 = arith.mulf %98, %99 : vector<8x32xf32>
    %101 = vector.broadcast %78 : vector<1x32xf32> to vector<8x32xf32>
    %102 = arith.addf %100, %101 : vector<8x32xf32>
    %103 = arith.truncf %102 : vector<8x32xf32> to vector<8x32xbf16>
    %c0_52 = arith.constant 0 : index
    %c0_53 = arith.constant 0 : index
    %c0_54 = arith.constant 0 : index
    %104 = vector.load %arg12[%c0_52, %c0_53, %c0_54] : memref<1x32x128xbf16, #tpu.memory_space<vmem>>, vector<1x32x128xbf16>
    %105 = vector.shape_cast %104 : vector<1x32x128xbf16> to vector<32x128xbf16>
    %cst_55 = arith.constant dense<0.000000e+00> : vector<8x128xf32>
    %106 = tpu.matmul %103, %105, %cst_55 {dimension_numbers = #tpu.dot_dimension_numbers<[1], [0], [0], [1], [0, 0, 1, 1], [], []>} : vector<8x32xbf16>, vector<32x128xbf16>, vector<8x128xf32> -> vector<8x128xf32>
    %c0_56 = arith.constant 0 : index
    %c0_57 = arith.constant 0 : index
    %c0_58 = arith.constant 0 : index
    %107 = vector.load %arg13[%c0_56, %c0_57, %c0_58] : memref<1x1x128xf32, #tpu.memory_space<vmem>>, vector<1x1x128xf32>
    %108 = vector.shape_cast %107 : vector<1x1x128xf32> to vector<1x128xf32>
    %109 = vector.broadcast %108 : vector<1x128xf32> to vector<8x128xf32>
    %110 = arith.addf %106, %109 : vector<8x128xf32>
    %111 = arith.mulf %110, %110 : vector<8x128xf32>
    %112 = arith.mulf %110, %111 : vector<8x128xf32>
    %cst_59 = arith.constant 4.471500e-02 : f32
    %113 = vector.broadcast %cst_59 : f32 to vector<8x128xf32>
    %114 = arith.mulf %113, %112 : vector<8x128xf32>
    %115 = arith.addf %110, %114 : vector<8x128xf32>
    %cst_60 = arith.constant 0.797884583 : f32
    %116 = vector.broadcast %cst_60 : f32 to vector<8x128xf32>
    %117 = arith.mulf %116, %115 : vector<8x128xf32>
    %118 = math.tanh %117 : vector<8x128xf32>
    %cst_61 = arith.constant 1.000000e+00 : f32
    %119 = vector.broadcast %cst_61 : f32 to vector<8x128xf32>
    %120 = arith.addf %119, %118 : vector<8x128xf32>
    %cst_62 = arith.constant 5.000000e-01 : f32
    %121 = vector.broadcast %cst_62 : f32 to vector<8x128xf32>
    %122 = arith.mulf %121, %120 : vector<8x128xf32>
    %123 = arith.mulf %110, %122 : vector<8x128xf32>
    %124 = arith.truncf %123 : vector<8x128xf32> to vector<8x128xbf16>
    %c0_63 = arith.constant 0 : index
    %c0_64 = arith.constant 0 : index
    %c0_65 = arith.constant 0 : index
    %125 = vector.load %arg14[%c0_63, %c0_64, %c0_65] : memref<1x128x32xbf16, #tpu.memory_space<vmem>>, vector<1x128x32xbf16>
    %126 = vector.shape_cast %125 : vector<1x128x32xbf16> to vector<128x32xbf16>
    %cst_66 = arith.constant dense<0.000000e+00> : vector<8x32xf32>
    %127 = tpu.matmul %124, %126, %cst_66 {dimension_numbers = #tpu.dot_dimension_numbers<[1], [0], [0], [1], [0, 0, 1, 1], [], []>} : vector<8x128xbf16>, vector<128x32xbf16>, vector<8x32xf32> -> vector<8x32xf32>
    %c0_67 = arith.constant 0 : index
    %c0_68 = arith.constant 0 : index
    %c0_69 = arith.constant 0 : index
    %128 = vector.load %arg15[%c0_67, %c0_68, %c0_69] : memref<1x1x32xf32, #tpu.memory_space<vmem>>, vector<1x1x32xf32>
    %129 = vector.shape_cast %128 : vector<1x1x32xf32> to vector<1x32xf32>
    %130 = vector.broadcast %129 : vector<1x32xf32> to vector<8x32xf32>
    %131 = arith.addf %127, %130 : vector<8x32xf32>
    %132 = arith.addf %102, %131 : vector<8x32xf32>
    %c0_70 = arith.constant 0 : index
    %c0_71 = arith.constant 0 : index
    %c0_72 = arith.constant 0 : index
    %133 = vector.load %arg16[%c0_70, %c0_71, %c0_72] : memref<1x1x32xf32, #tpu.memory_space<vmem>>, vector<1x1x32xf32>
    %134 = vector.shape_cast %133 : vector<1x1x32xf32> to vector<1x32xf32>
    %c0_73 = arith.constant 0 : index
    %c0_74 = arith.constant 0 : index
    %c0_75 = arith.constant 0 : index
    %135 = vector.load %arg17[%c0_73, %c0_74, %c0_75] : memref<1x1x32xf32, #tpu.memory_space<vmem>>, vector<1x1x32xf32>
    %136 = vector.shape_cast %135 : vector<1x1x32xf32> to vector<1x32xf32>
    %cst_76 = arith.constant dense<0.000000e+00> : vector<8xf32>
    %137 = vector.multi_reduction <add>, %132, %cst_76 [1] : vector<8x32xf32> to vector<8xf32>
    %138 = vector.shape_cast %137 : vector<8xf32> to vector<8x1xf32>
    %cst_77 = arith.constant 3.200000e+01 : f32
    %139 = vector.broadcast %cst_77 : f32 to vector<8x1xf32>
    %140 = arith.divf %138, %139 : vector<8x1xf32>
    %141 = vector.broadcast %140 : vector<8x1xf32> to vector<8x32xf32>
    %142 = arith.subf %132, %141 : vector<8x32xf32>
    %143 = vector.broadcast %140 : vector<8x1xf32> to vector<8x32xf32>
    %144 = arith.subf %132, %143 : vector<8x32xf32>
    %145 = arith.mulf %142, %144 : vector<8x32xf32>
    %cst_78 = arith.constant dense<0.000000e+00> : vector<8xf32>
    %146 = vector.multi_reduction <add>, %145, %cst_78 [1] : vector<8x32xf32> to vector<8xf32>
    %147 = vector.shape_cast %146 : vector<8xf32> to vector<8x1xf32>
    %cst_79 = arith.constant 3.200000e+01 : f32
    %148 = vector.broadcast %cst_79 : f32 to vector<8x1xf32>
    %149 = arith.divf %147, %148 : vector<8x1xf32>
    %150 = vector.broadcast %140 : vector<8x1xf32> to vector<8x32xf32>
    %151 = arith.subf %132, %150 : vector<8x32xf32>
    %cst_80 = arith.constant 9.99999996E-13 : f32
    %152 = vector.broadcast %cst_80 : f32 to vector<8x1xf32>
    %153 = arith.addf %149, %152 : vector<8x1xf32>
    %154 = math.rsqrt %153 : vector<8x1xf32>
    %155 = vector.broadcast %154 : vector<8x1xf32> to vector<8x32xf32>
    %156 = arith.mulf %151, %155 : vector<8x32xf32>
    %157 = vector.broadcast %134 : vector<1x32xf32> to vector<8x32xf32>
    %158 = arith.mulf %156, %157 : vector<8x32xf32>
    %159 = vector.broadcast %136 : vector<1x32xf32> to vector<8x32xf32>
    %160 = arith.addf %158, %159 : vector<8x32xf32>
    %c0_81 = arith.constant 0 : index
    %c0_82 = arith.constant 0 : index
    %161 = vector.load %arg19[%c0_81, %c0_82] : memref<8x32xf32, #tpu.memory_space<vmem>>, vector<8x32xf32>
    tpu.vector_store %arg19[%c0_81, %c0_82], %160 {strides = array<i32>} : memref<8x32xf32, #tpu.memory_space<vmem>>, vector<8x32xf32>,
    %c1_i32 = arith.constant 1 : i32
    %162 = arith.cmpi eq, %arg1, %c1_i32 : i32
    %163 = arith.extui %162 : i1 to i32
    %c0_i32_83 = arith.constant 0 : i32
    %164 = arith.cmpi ne, %163, %c0_i32_83 : i32
    scf.if %164 {
      %165 = vector.extract_strided_slice %160 {offsets = [0, 0], sizes = [1, 32], strides = [1, 1]} : vector<8x32xf32> to vector<1x32xf32>
      %166 = arith.mulf %165, %165 : vector<1x32xf32>
      %cst_84 = arith.constant dense<0.000000e+00> : vector<1xf32>
      %167 = vector.multi_reduction <add>, %166, %cst_84 [1] : vector<1x32xf32> to vector<1xf32>
      %168 = vector.shape_cast %167 : vector<1xf32> to vector<1x1xf32>
      %169 = math.sqrt %168 : vector<1x1xf32>
      %cst_85 = arith.constant 9.99999996E-13 : f32
      %170 = vector.broadcast %cst_85 : f32 to vector<1x1xf32>
      %171 = arith.maximumf %169, %170 : vector<1x1xf32>
      %172 = vector.broadcast %171 : vector<1x1xf32> to vector<1x32xf32>
      %173 = arith.divf %165, %172 : vector<1x32xf32>
      %c0_86 = arith.constant 0 : index
      %c0_87 = arith.constant 0 : index
      %c0_88 = arith.constant 0 : index
      %174 = vector.load %arg18[%c0_86, %c0_87, %c0_88] : memref<1x1x32xf32, #tpu.memory_space<vmem>>, vector<1x1x32xf32>
      %175 = vector.shape_cast %174 : vector<1x1x32xf32> to vector<1x32xf32>
      %176 = vector.shape_cast %173 : vector<1x32xf32> to vector<1x1x32xf32>
      tpu.vector_store %arg18[%c0_86, %c0_87, %c0_88], %176 {strides = array<i32>} : memref<1x1x32xf32, #tpu.memory_space<vmem>>, vector<1x1x32xf32>,
    } else {
    }
    return
  }
  func.func @transform_0(%arg0: i32, %arg1: i32) -> (i32, i32, i32) {
    %c0_i32 = arith.constant 0 : i32
    %c0_i32_0 = arith.constant 0 : i32
    %c0_i32_1 = arith.constant 0 : i32
    return %arg0, %c0_i32, %c0_i32_0 : i32, i32, i32
  }
  func.func @transform_1(%arg0: i32, %arg1: i32) -> (i32, i32, i32) {
    %c0_i32 = arith.constant 0 : i32
    %c0_i32_0 = arith.constant 0 : i32
    %c0_i32_1 = arith.constant 0 : i32
    return %arg0, %c0_i32, %c0_i32_0 : i32, i32, i32
  }
  func.func @transform_2(%arg0: i32, %arg1: i32) -> (i32, i32) {
    %c0_i32 = arith.constant 0 : i32
    %c0_i32_0 = arith.constant 0 : i32
    %c0_i32_1 = arith.constant 0 : i32
    return %c0_i32, %c0_i32_0 : i32, i32
  }
  func.func @transform_3(%arg0: i32, %arg1: i32) -> (i32, i32) {
    %c0_i32 = arith.constant 0 : i32
    %c0_i32_0 = arith.constant 0 : i32
    %c0_i32_1 = arith.constant 0 : i32
    return %c0_i32, %c0_i32_0 : i32, i32
  }
  func.func @transform_4(%arg0: i32, %arg1: i32) -> (i32, i32, i32) {
    %c0_i32 = arith.constant 0 : i32
    %c0_i32_0 = arith.constant 0 : i32
    %c0_i32_1 = arith.constant 0 : i32
    return %arg1, %c0_i32, %c0_i32_0 : i32, i32, i32
  }
  func.func @transform_5(%arg0: i32, %arg1: i32) -> (i32, i32, i32) {
    %c0_i32 = arith.constant 0 : i32
    %c0_i32_0 = arith.constant 0 : i32
    %c0_i32_1 = arith.constant 0 : i32
    return %arg1, %c0_i32, %c0_i32_0 : i32, i32, i32
  }
  func.func @transform_6(%arg0: i32, %arg1: i32) -> (i32, i32, i32) {
    %c0_i32 = arith.constant 0 : i32
    %c0_i32_0 = arith.constant 0 : i32
    %c0_i32_1 = arith.constant 0 : i32
    return %arg1, %c0_i32, %c0_i32_0 : i32, i32, i32
  }
  func.func @transform_7(%arg0: i32, %arg1: i32) -> (i32, i32, i32) {
    %c0_i32 = arith.constant 0 : i32
    %c0_i32_0 = arith.constant 0 : i32
    %c0_i32_1 = arith.constant 0 : i32
    return %arg1, %c0_i32, %c0_i32_0 : i32, i32, i32
  }
  func.func @transform_8(%arg0: i32, %arg1: i32) -> (i32, i32, i32) {
    %c0_i32 = arith.constant 0 : i32
    %c0_i32_0 = arith.constant 0 : i32
    %c0_i32_1 = arith.constant 0 : i32
    return %arg1, %c0_i32, %c0_i32_0 : i32, i32, i32
  }
  func.func @transform_9(%arg0: i32, %arg1: i32) -> (i32, i32, i32) {
    %c0_i32 = arith.constant 0 : i32
    %c0_i32_0 = arith.constant 0 : i32
    %c0_i32_1 = arith.constant 0 : i32
    return %arg1, %c0_i32, %c0_i32_0 : i32, i32, i32
  }
  func.func @transform_10(%arg0: i32, %arg1: i32) -> (i32, i32, i32) {
    %c0_i32 = arith.constant 0 : i32
    %c0_i32_0 = arith.constant 0 : i32
    %c0_i32_1 = arith.constant 0 : i32
    return %arg1, %c0_i32, %c0_i32_0 : i32, i32, i32
  }
  func.func @transform_11(%arg0: i32, %arg1: i32) -> (i32, i32, i32) {
    %c0_i32 = arith.constant 0 : i32
    %c0_i32_0 = arith.constant 0 : i32
    %c0_i32_1 = arith.constant 0 : i32
    return %arg1, %c0_i32, %c0_i32_0 : i32, i32, i32
  }
  func.func @transform_12(%arg0: i32, %arg1: i32) -> (i32, i32, i32) {
    %c0_i32 = arith.constant 0 : i32
    %c0_i32_0 = arith.constant 0 : i32
    %c0_i32_1 = arith.constant 0 : i32
    return %arg1, %c0_i32, %c0_i32_0 : i32, i32, i32
  }
  func.func @transform_13(%arg0: i32, %arg1: i32) -> (i32, i32, i32) {
    %c0_i32 = arith.constant 0 : i32
    %c0_i32_0 = arith.constant 0 : i32
    %c0_i32_1 = arith.constant 0 : i32
    return %arg1, %c0_i32, %c0_i32_0 : i32, i32, i32
  }
  func.func @transform_14(%arg0: i32, %arg1: i32) -> (i32, i32, i32) {
    %c0_i32 = arith.constant 0 : i32
    %c0_i32_0 = arith.constant 0 : i32
    %c0_i32_1 = arith.constant 0 : i32
    return %arg1, %c0_i32, %c0_i32_0 : i32, i32, i32
  }
  func.func @transform_15(%arg0: i32, %arg1: i32) -> (i32, i32, i32) {
    %c0_i32 = arith.constant 0 : i32
    %c0_i32_0 = arith.constant 0 : i32
    %c0_i32_1 = arith.constant 0 : i32
    return %arg1, %c0_i32, %c0_i32_0 : i32, i32, i32
  }
  func.func @transform_16(%arg0: i32, %arg1: i32) -> (i32, i32, i32) {
    %c0_i32 = arith.constant 0 : i32
    %c0_i32_0 = arith.constant 0 : i32
    %c0_i32_1 = arith.constant 0 : i32
    return %arg0, %c0_i32, %c0_i32_0 : i32, i32, i32
  }
}

</mosaic_0001>

<llo_original>
// kernel: bert_forward.1
$region0: #{bert_forward.1}
  #allocation0 [shape = 'u32[]', space=smem, size = 0x4, offset = 0x4, fixed_abs, tag = 'smem constant byte address 0x4 - core index']
  #allocation1 [shape = 'u32[144,128]{1,0:T(1,128)}', space=vmem, size = 0x12000, scoped, tag = 'internal scratch']
  #allocation2 [shape = 'f32[8,32]{1,0:T(8,128)}', space=vmem, size = 0x1000, scoped, tag = 'scratch operand']
  #allocation3 [shape = 'f32[4,8,24]{2,1,0:T(8,128)}', space=vmem, size = 0x4000, scoped, tag = 'scratch operand']
  #allocation4 [shape = 'f32[8,32]{1,0:T(8,128)}', space=vmem, size = 0x1000, scoped, tag = 'scratch operand']
  %s0 = inlined_call_operand.vmem [shape: f32[2,8,32], index: 0, kind: input, shape index: {}]
  %s1 = inlined_call_operand.vmem [shape: f32[2,1,8], index: 1, kind: input, shape index: {}]
  %s2 = inlined_call_operand.vmem [shape: f32[1,32], index: 2, kind: input, shape index: {}]
  %s3 = inlined_call_operand.vmem [shape: f32[1,32], index: 3, kind: input, shape index: {}]
  %s4 = inlined_call_operand.vmem [shape: bf16[2,32,96], index: 4, kind: input, shape index: {}]
  %s5 = inlined_call_operand.vmem [shape: f32[2,1,96], index: 5, kind: input, shape index: {}]
  %s6 = inlined_call_operand.vmem [shape: bf16[2,32,32], index: 6, kind: input, shape index: {}]
  %s7 = inlined_call_operand.vmem [shape: f32[2,1,32], index: 7, kind: input, shape index: {}]
  %s8 = inlined_call_operand.vmem [shape: f32[2,1,32], index: 8, kind: input, shape index: {}]
  %s9 = inlined_call_operand.vmem [shape: f32[2,1,32], index: 9, kind: input, shape index: {}]
  %s10 = inlined_call_operand.vmem [shape: bf16[2,32,128], index: 10, kind: input, shape index: {}]
  %s11 = inlined_call_operand.vmem [shape: f32[2,1,128], index: 11, kind: input, shape index: {}]
  %s12 = inlined_call_operand.vmem [shape: bf16[2,128,32], index: 12, kind: input, shape index: {}]
  %s13 = inlined_call_operand.vmem [shape: f32[2,1,32], index: 13, kind: input, shape index: {}]
  %s14 = inlined_call_operand.vmem [shape: f32[2,1,32], index: 14, kind: input, shape index: {}]
  %s15 = inlined_call_operand.vmem [shape: f32[2,1,32], index: 15, kind: input, shape index: {}]
  %s16 = inlined_call_operand.hbm [shape: f32[2,1,32], index: 16, kind: output, shape index: {}]
  %s17 = sld [smem:[#allocation0]]
  $region105: #{bert_forward.1} parent=0
    _
  %s19 = ssub.s32 1, %s17
  %s20 = scalar_select 0, %s19, %s17
  $region1: #{bert_forward.1} parent=0
    #allocation5 [shape = 'u8[1024]{0}', space=vmem, size = 0x400, scoped, tag = 'output window, operand 0']
    #allocation6 [shape = 's32[2]{0}', space=sflag, size = 0x8, scoped, tag = 'scoped memory for bert_forward.1']
    %21 = vsyncpa [#allocation6], 0
    %s22 = scalar_lea.sflag [#allocation6], 1
    %23 = vsyncpa %s22, 0
    loop: start=0, step=1, limit=6
    $region2: #{bert_forward.1} parent=1 // loop_pre_header
      _
    $region3: #{bert_forward.1} parent=1 // loop_header
      %s25 = sphi 0, %s29
      %p26 = scmp.ge.s32.totalorder %s25, 6
      %s32 = sphi 0, %s44
      %s33 = sphi 0, %s40
      %s34 = sphi 0, %s32
      %s35 = sphi 0, %s33
      %s36 = sphi 0, %s34
      %s37 = sphi 0, %s35
      %s47 = sphi 0, %s49
      %s50 = sphi 0, %s47
      %s51 = sphi 0, %s50
      %s67 = sphi 0, %s51
      %s73 = sphi 0, %s75
      %s76 = sphi 0, %s73
      %s77 = sphi 0, %s76
      %s93 = sphi 0, %s77
      %s97 = sphi 0, %s97
      %s99 = sphi 0, %s97
      %s100 = sphi 0, %s99
      %s114 = sphi 0, %s100
      %s118 = sphi 0, %s118
      %s120 = sphi 0, %s118
      %s121 = sphi 0, %s120
      %s135 = sphi 0, %s121
      %s141 = sphi 0, %s143
      %s144 = sphi 0, %s141
      %s145 = sphi 0, %s144
      %s161 = sphi 0, %s145
      %s167 = sphi 0, %s169
      %s170 = sphi 0, %s167
      %s171 = sphi 0, %s170
      %s187 = sphi 0, %s171
      %s193 = sphi 0, %s195
      %s196 = sphi 0, %s193
      %s197 = sphi 0, %s196
      %s213 = sphi 0, %s197
      %s219 = sphi 0, %s221
      %s222 = sphi 0, %s219
      %s223 = sphi 0, %s222
      %s239 = sphi 0, %s223
      %s245 = sphi 0, %s247
      %s248 = sphi 0, %s245
      %s249 = sphi 0, %s248
      %s265 = sphi 0, %s249
      %s271 = sphi 0, %s273
      %s274 = sphi 0, %s271
      %s275 = sphi 0, %s274
      %s291 = sphi 0, %s275
      %s297 = sphi 0, %s299
      %s300 = sphi 0, %s297
      %s301 = sphi 0, %s300
      %s317 = sphi 0, %s301
      %s323 = sphi 0, %s325
      %s326 = sphi 0, %s323
      %s327 = sphi 0, %s326
      %s343 = sphi 0, %s327
      %s349 = sphi 0, %s351
      %s352 = sphi 0, %s349
      %s353 = sphi 0, %s352
      %s369 = sphi 0, %s353
      %s375 = sphi 0, %s377
      %s378 = sphi 0, %s375
      %s379 = sphi 0, %s378
      %s395 = sphi 0, %s379
      %s401 = sphi 0, %s403
      %s404 = sphi 0, %s401
      %s405 = sphi 0, %s404
      %s421 = sphi 0, %s405
      %s427 = sphi 0, %s429
      %s430 = sphi 0, %s427
      %s431 = sphi 0, %s430
      %s447 = sphi 0, %s431
      %s453 = sphi 0, %s455
      %s456 = sphi 0, %s453
      %s457 = sphi 0, %s456
      %s473 = sphi 0, %s457
    $region4: #{bert_forward.1} parent=1 // loop_header_branch
      %28 = sbr.rel (%p26) target = $region8
    $region5: #{bert_forward.1} parent=1 // loop_body
      %s30 = ssub.s32 %s25, 1
      %s31 = ssub.s32 %s25, 2
      %s38 = sadd.s32 1, %s33
      %p39 = scmp.ge.s32.totalorder %s38, 2
      %s40 = scalar_select %p39, 0, %s38
      %s41 = sadd.s32 1, %s32
      %s42 = scalar_select %p39, %s41, %s32
      %p43 = scmp.ge.s32.totalorder %s42, 2
      %s44 = scalar_select %p43, 0, %s42
      %s45 = ssub.s32 %s32, %s44
      %p46 = scmp.eq.s32.totalorder %s45, 0
      %s48 = sadd.s32 %s47, 1
      %s49 = scalar_select %p46, %s47, %s48
      %p52 = pneg %p46
      %p53 = scmp.eq.s32.totalorder %s25, 3
      %p54 = por %p52, %p53
      %p55 = scmp.ne.s32.totalorder %s47, %s50
      %p56 = scmp.eq.s32.totalorder %s25, 0
      %p57 = por %p55, %p56
      %p58 = scmp.ne.s32.totalorder %s47, %s50
      %p59 = scmp.eq.s32.totalorder %s30, 3
      %p60 = por %p58, %p59
      %p61 = scmp.ne.s32.totalorder %s50, %s51
      %p62 = scmp.eq.s32.totalorder %s30, 0
      %p63 = por %p61, %p62
      %p64 = scmp.ne.s32.totalorder %s50, %s51
      %p65 = scmp.eq.s32.totalorder %s31, 3
      %p66 = por %p64, %p65
      %p68 = scmp.ne.s32.totalorder %s51, %s67
      %p69 = scmp.eq.s32.totalorder %s31, 0
      %p70 = por %p68, %p69
      %s71 = ssub.s32 %s32, %s44
      %p72 = scmp.eq.s32.totalorder %s71, 0
      %s74 = sadd.s32 %s73, 1
      %s75 = scalar_select %p72, %s73, %s74
      %p78 = pneg %p72
      %p79 = scmp.eq.s32.totalorder %s25, 3
      %p80 = por %p78, %p79
      %p81 = scmp.ne.s32.totalorder %s73, %s76
      %p82 = scmp.eq.s32.totalorder %s25, 0
      %p83 = por %p81, %p82
      %p84 = scmp.ne.s32.totalorder %s73, %s76
      %p85 = scmp.eq.s32.totalorder %s30, 3
      %p86 = por %p84, %p85
      %p87 = scmp.ne.s32.totalorder %s76, %s77
      %p88 = scmp.eq.s32.totalorder %s30, 0
      %p89 = por %p87, %p88
      %p90 = scmp.ne.s32.totalorder %s76, %s77
      %p91 = scmp.eq.s32.totalorder %s31, 3
      %p92 = por %p90, %p91
      %p94 = scmp.ne.s32.totalorder %s77, %s93
      %p95 = scmp.eq.s32.totalorder %s31, 0
      %p96 = por %p94, %p95
      %s98 = sadd.s32 %s97, 1
      %p101 = scmp.eq.s32.totalorder %s25, 3
      %p102 = scmp.ne.s32.totalorder %s97, %s99
      %p103 = scmp.eq.s32.totalorder %s25, 0
      %p104 = por %p102, %p103
      %p105 = scmp.ne.s32.totalorder %s97, %s99
      %p106 = scmp.eq.s32.totalorder %s30, 3
      %p107 = por %p105, %p106
      %p108 = scmp.ne.s32.totalorder %s99, %s100
      %p109 = scmp.eq.s32.totalorder %s30, 0
      %p110 = por %p108, %p109
      %p111 = scmp.ne.s32.totalorder %s99, %s100
      %p112 = scmp.eq.s32.totalorder %s31, 3
      %p113 = por %p111, %p112
      %p115 = scmp.ne.s32.totalorder %s100, %s114
      %p116 = scmp.eq.s32.totalorder %s31, 0
      %p117 = por %p115, %p116
      %s119 = sadd.s32 %s118, 1
      %p122 = scmp.eq.s32.totalorder %s25, 3
      %p123 = scmp.ne.s32.totalorder %s118, %s120
      %p124 = scmp.eq.s32.totalorder %s25, 0
      %p125 = por %p123, %p124
      %p126 = scmp.ne.s32.totalorder %s118, %s120
      %p127 = scmp.eq.s32.totalorder %s30, 3
      %p128 = por %p126, %p127
      %p129 = scmp.ne.s32.totalorder %s120, %s121
      %p130 = scmp.eq.s32.totalorder %s30, 0
      %p131 = por %p129, %p130
      %p132 = scmp.ne.s32.totalorder %s120, %s121
      %p133 = scmp.eq.s32.totalorder %s31, 3
      %p134 = por %p132, %p133
      %p136 = scmp.ne.s32.totalorder %s121, %s135
      %p137 = scmp.eq.s32.totalorder %s31, 0
      %p138 = por %p136, %p137
      %s139 = ssub.s32 %s33, %s40
      %p140 = scmp.eq.s32.totalorder %s139, 0
      %s142 = sadd.s32 %s141, 1
      %s143 = scalar_select %p140, %s141, %s142
      %p146 = pneg %p140
      %p147 = scmp.eq.s32.totalorder %s25, 3
      %p148 = por %p146, %p147
      %p149 = scmp.ne.s32.totalorder %s141, %s144
      %p150 = scmp.eq.s32.totalorder %s25, 0
      %p151 = por %p149, %p150
      %p152 = scmp.ne.s32.totalorder %s141, %s144
      %p153 = scmp.eq.s32.totalorder %s30, 3
      %p154 = por %p152, %p153
      %p155 = scmp.ne.s32.totalorder %s144, %s145
      %p156 = scmp.eq.s32.totalorder %s30, 0
      %p157 = por %p155, %p156
      %p158 = scmp.ne.s32.totalorder %s144, %s145
      %p159 = scmp.eq.s32.totalorder %s31, 3
      %p160 = por %p158, %p159
      %p162 = scmp.ne.s32.totalorder %s145, %s161
      %p163 = scmp.eq.s32.totalorder %s31, 0
      %p164 = por %p162, %p163
      %s165 = ssub.s32 %s33, %s40
      %p166 = scmp.eq.s32.totalorder %s165, 0
      %s168 = sadd.s32 %s167, 1
      %s169 = scalar_select %p166, %s167, %s168
      %p172 = pneg %p166
      %p173 = scmp.eq.s32.totalorder %s25, 3
      %p174 = por %p172, %p173
      %p175 = scmp.ne.s32.totalorder %s167, %s170
      %p176 = scmp.eq.s32.totalorder %s25, 0
      %p177 = por %p175, %p176
      %p178 = scmp.ne.s32.totalorder %s167, %s170
      %p179 = scmp.eq.s32.totalorder %s30, 3
      %p180 = por %p178, %p179
      %p181 = scmp.ne.s32.totalorder %s170, %s171
      %p182 = scmp.eq.s32.totalorder %s30, 0
      %p183 = por %p181, %p182
      %p184 = scmp.ne.s32.totalorder %s170, %s171
      %p185 = scmp.eq.s32.totalorder %s31, 3
      %p186 = por %p184, %p185
      %p188 = scmp.ne.s32.totalorder %s171, %s187
      %p189 = scmp.eq.s32.totalorder %s31, 0
      %p190 = por %p188, %p189
      %s191 = ssub.s32 %s33, %s40
      %p192 = scmp.eq.s32.totalorder %s191, 0
      %s194 = sadd.s32 %s193, 1
      %s195 = scalar_select %p192, %s193, %s194
      %p198 = pneg %p192
      %p199 = scmp.eq.s32.totalorder %s25, 3
      %p200 = por %p198, %p199
      %p201 = scmp.ne.s32.totalorder %s193, %s196
      %p202 = scmp.eq.s32.totalorder %s25, 0
      %p203 = por %p201, %p202
      %p204 = scmp.ne.s32.totalorder %s193, %s196
      %p205 = scmp.eq.s32.totalorder %s30, 3
      %p206 = por %p204, %p205
      %p207 = scmp.ne.s32.totalorder %s196, %s197
      %p208 = scmp.eq.s32.totalorder %s30, 0
      %p209 = por %p207, %p208
      %p210 = scmp.ne.s32.totalorder %s196, %s197
      %p211 = scmp.eq.s32.totalorder %s31, 3
      %p212 = por %p210, %p211
      %p214 = scmp.ne.s32.totalorder %s197, %s213
      %p215 = scmp.eq.s32.totalorder %s31, 0
      %p216 = por %p214, %p215
      %s217 = ssub.s32 %s33, %s40
      %p218 = scmp.eq.s32.totalorder %s217, 0
      %s220 = sadd.s32 %s219, 1
      %s221 = scalar_select %p218, %s219, %s220
      %p224 = pneg %p218
      %p225 = scmp.eq.s32.totalorder %s25, 3
      %p226 = por %p224, %p225
      %p227 = scmp.ne.s32.totalorder %s219, %s222
      %p228 = scmp.eq.s32.totalorder %s25, 0
      %p229 = por %p227, %p228
      %p230 = scmp.ne.s32.totalorder %s219, %s222
      %p231 = scmp.eq.s32.totalorder %s30, 3
      %p232 = por %p230, %p231
      %p233 = scmp.ne.s32.totalorder %s222, %s223
      %p234 = scmp.eq.s32.totalorder %s30, 0
      %p235 = por %p233, %p234
      %p236 = scmp.ne.s32.totalorder %s222, %s223
      %p237 = scmp.eq.s32.totalorder %s31, 3
      %p238 = por %p236, %p237
      %p240 = scmp.ne.s32.totalorder %s223, %s239
      %p241 = scmp.eq.s32.totalorder %s31, 0
      %p242 = por %p240, %p241
      %s243 = ssub.s32 %s33, %s40
      %p244 = scmp.eq.s32.totalorder %s243, 0
      %s246 = sadd.s32 %s245, 1
      %s247 = scalar_select %p244, %s245, %s246
      %p250 = pneg %p244
      %p251 = scmp.eq.s32.totalorder %s25, 3
      %p252 = por %p250, %p251
      %p253 = scmp.ne.s32.totalorder %s245, %s248
      %p254 = scmp.eq.s32.totalorder %s25, 0
      %p255 = por %p253, %p254
      %p256 = scmp.ne.s32.totalorder %s245, %s248
      %p257 = scmp.eq.s32.totalorder %s30, 3
      %p258 = por %p256, %p257
      %p259 = scmp.ne.s32.totalorder %s248, %s249
      %p260 = scmp.eq.s32.totalorder %s30, 0
      %p261 = por %p259, %p260
      %p262 = scmp.ne.s32.totalorder %s248, %s249
      %p263 = scmp.eq.s32.totalorder %s31, 3
      %p264 = por %p262, %p263
      %p266 = scmp.ne.s32.totalorder %s249, %s265
      %p267 = scmp.eq.s32.totalorder %s31, 0
      %p268 = por %p266, %p267
      %s269 = ssub.s32 %s33, %s40
      %p270 = scmp.eq.s32.totalorder %s269, 0
      %s272 = sadd.s32 %s271, 1
      %s273 = scalar_select %p270, %s271, %s272
      %p276 = pneg %p270
      %p277 = scmp.eq.s32.totalorder %s25, 3
      %p278 = por %p276, %p277
      %p279 = scmp.ne.s32.totalorder %s271, %s274
      %p280 = scmp.eq.s32.totalorder %s25, 0
      %p281 = por %p279, %p280
      %p282 = scmp.ne.s32.totalorder %s271, %s274
      %p283 = scmp.eq.s32.totalorder %s30, 3
      %p284 = por %p282, %p283
      %p285 = scmp.ne.s32.totalorder %s274, %s275
      %p286 = scmp.eq.s32.totalorder %s30, 0
      %p287 = por %p285, %p286
      %p288 = scmp.ne.s32.totalorder %s274, %s275
      %p289 = scmp.eq.s32.totalorder %s31, 3
      %p290 = por %p288, %p289
      %p292 = scmp.ne.s32.totalorder %s275, %s291
      %p293 = scmp.eq.s32.totalorder %s31, 0
      %p294 = por %p292, %p293
      %s295 = ssub.s32 %s33, %s40
      %p296 = scmp.eq.s32.totalorder %s295, 0
      %s298 = sadd.s32 %s297, 1
      %s299 = scalar_select %p296, %s297, %s298
      %p302 = pneg %p296
      %p303 = scmp.eq.s32.totalorder %s25, 3
      %p304 = por %p302, %p303
      %p305 = scmp.ne.s32.totalorder %s297, %s300
      %p306 = scmp.eq.s32.totalorder %s25, 0
      %p307 = por %p305, %p306
      %p308 = scmp.ne.s32.totalorder %s297, %s300
      %p309 = scmp.eq.s32.totalorder %s30, 3
      %p310 = por %p308, %p309
      %p311 = scmp.ne.s32.totalorder %s300, %s301
      %p312 = scmp.eq.s32.totalorder %s30, 0
      %p313 = por %p311, %p312
      %p314 = scmp.ne.s32.totalorder %s300, %s301
      %p315 = scmp.eq.s32.totalorder %s31, 3
      %p316 = por %p314, %p315
      %p318 = scmp.ne.s32.totalorder %s301, %s317
      %p319 = scmp.eq.s32.totalorder %s31, 0
      %p320 = por %p318, %p319
      %s321 = ssub.s32 %s33, %s40
      %p322 = scmp.eq.s32.totalorder %s321, 0
      %s324 = sadd.s32 %s323, 1
      %s325 = scalar_select %p322, %s323, %s324
      %p328 = pneg %p322
      %p329 = scmp.eq.s32.totalorder %s25, 3
      %p330 = por %p328, %p329
      %p331 = scmp.ne.s32.totalorder %s323, %s326
      %p332 = scmp.eq.s32.totalorder %s25, 0
      %p333 = por %p331, %p332
      %p334 = scmp.ne.s32.totalorder %s323, %s326
      %p335 = scmp.eq.s32.totalorder %s30, 3
      %p336 = por %p334, %p335
      %p337 = scmp.ne.s32.totalorder %s326, %s327
      %p338 = scmp.eq.s32.totalorder %s30, 0
      %p339 = por %p337, %p338
      %p340 = scmp.ne.s32.totalorder %s326, %s327
      %p341 = scmp.eq.s32.totalorder %s31, 3
      %p342 = por %p340, %p341
      %p344 = scmp.ne.s32.totalorder %s327, %s343
      %p345 = scmp.eq.s32.totalorder %s31, 0
      %p346 = por %p344, %p345
      %s347 = ssub.s32 %s33, %s40
      %p348 = scmp.eq.s32.totalorder %s347, 0
      %s350 = sadd.s32 %s349, 1
      %s351 = scalar_select %p348, %s349, %s350
      %p354 = pneg %p348
      %p355 = scmp.eq.s32.totalorder %s25, 3
      %p356 = por %p354, %p355
      %p357 = scmp.ne.s32.totalorder %s349, %s352
      %p358 = scmp.eq.s32.totalorder %s25, 0
      %p359 = por %p357, %p358
      %p360 = scmp.ne.s32.totalorder %s349, %s352
      %p361 = scmp.eq.s32.totalorder %s30, 3
      %p362 = por %p360, %p361
      %p363 = scmp.ne.s32.totalorder %s352, %s353
      %p364 = scmp.eq.s32.totalorder %s30, 0
      %p365 = por %p363, %p364
      %p366 = scmp.ne.s32.totalorder %s352, %s353
      %p367 = scmp.eq.s32.totalorder %s31, 3
      %p368 = por %p366, %p367
      %p370 = scmp.ne.s32.totalorder %s353, %s369
      %p371 = scmp.eq.s32.totalorder %s31, 0
      %p372 = por %p370, %p371
      %s373 = ssub.s32 %s33, %s40
      %p374 = scmp.eq.s32.totalorder %s373, 0
      %s376 = sadd.s32 %s375, 1
      %s377 = scalar_select %p374, %s375, %s376
      %p380 = pneg %p374
      %p381 = scmp.eq.s32.totalorder %s25, 3
      %p382 = por %p380, %p381
      %p383 = scmp.ne.s32.totalorder %s375, %s378
      %p384 = scmp.eq.s32.totalorder %s25, 0
      %p385 = por %p383, %p384
      %p386 = scmp.ne.s32.totalorder %s375, %s378
      %p387 = scmp.eq.s32.totalorder %s30, 3
      %p388 = por %p386, %p387
      %p389 = scmp.ne.s32.totalorder %s378, %s379
      %p390 = scmp.eq.s32.totalorder %s30, 0
      %p391 = por %p389, %p390
      %p392 = scmp.ne.s32.totalorder %s378, %s379
      %p393 = scmp.eq.s32.totalorder %s31, 3
      %p394 = por %p392, %p393
      %p396 = scmp.ne.s32.totalorder %s379, %s395
      %p397 = scmp.eq.s32.totalorder %s31, 0
      %p398 = por %p396, %p397
      %s399 = ssub.s32 %s33, %s40
      %p400 = scmp.eq.s32.totalorder %s399, 0
      %s402 = sadd.s32 %s401, 1
      %s403 = scalar_select %p400, %s401, %s402
      %p406 = pneg %p400
      %p407 = scmp.eq.s32.totalorder %s25, 3
      %p408 = por %p406, %p407
      %p409 = scmp.ne.s32.totalorder %s401, %s404
      %p410 = scmp.eq.s32.totalorder %s25, 0
      %p411 = por %p409, %p410
      %p412 = scmp.ne.s32.totalorder %s401, %s404
      %p413 = scmp.eq.s32.totalorder %s30, 3
      %p414 = por %p412, %p413
      %p415 = scmp.ne.s32.totalorder %s404, %s405
      %p416 = scmp.eq.s32.totalorder %s30, 0
      %p417 = por %p415, %p416
      %p418 = scmp.ne.s32.totalorder %s404, %s405
      %p419 = scmp.eq.s32.totalorder %s31, 3
      %p420 = por %p418, %p419
      %p422 = scmp.ne.s32.totalorder %s405, %s421
      %p423 = scmp.eq.s32.totalorder %s31, 0
      %p424 = por %p422, %p423
      %s425 = ssub.s32 %s33, %s40
      %p426 = scmp.eq.s32.totalorder %s425, 0
      %s428 = sadd.s32 %s427, 1
      %s429 = scalar_select %p426, %s427, %s428
      %p432 = pneg %p426
      %p433 = scmp.eq.s32.totalorder %s25, 3
      %p434 = por %p432, %p433
      %p435 = scmp.ne.s32.totalorder %s427, %s430
      %p436 = scmp.eq.s32.totalorder %s25, 0
      %p437 = por %p435, %p436
      %p438 = scmp.ne.s32.totalorder %s427, %s430
      %p439 = scmp.eq.s32.totalorder %s30, 3
      %p440 = por %p438, %p439
      %p441 = scmp.ne.s32.totalorder %s430, %s431
      %p442 = scmp.eq.s32.totalorder %s30, 0
      %p443 = por %p441, %p442
      %p444 = scmp.ne.s32.totalorder %s430, %s431
      %p445 = scmp.eq.s32.totalorder %s31, 3
      %p446 = por %p444, %p445
      %p448 = scmp.ne.s32.totalorder %s431, %s447
      %p449 = scmp.eq.s32.totalorder %s31, 0
      %p450 = por %p448, %p449
      %s451 = ssub.s32 %s32, %s44
      %p452 = scmp.eq.s32.totalorder %s451, 0
      %s454 = sadd.s32 %s453, 1
      %s455 = scalar_select %p452, %s453, %s454
      %p458 = pneg %p452
      %p459 = scmp.eq.s32.totalorder %s25, 3
      %p460 = por %p458, %p459
      %p461 = scmp.ne.s32.totalorder %s453, %s456
      %p462 = scmp.eq.s32.totalorder %s25, 0
      %p463 = por %p461, %p462
      %p464 = scmp.ne.s32.totalorder %s453, %s456
      %p465 = scmp.eq.s32.totalorder %s30, 3
      %p466 = por %p464, %p465
      %p467 = scmp.ne.s32.totalorder %s456, %s457
      %p468 = scmp.eq.s32.totalorder %s30, 0
      %p469 = por %p467, %p468
      %p470 = scmp.ne.s32.totalorder %s456, %s457
      %p471 = scmp.eq.s32.totalorder %s31, 3
      %p472 = por %p470, %p471
      %p474 = scmp.ne.s32.totalorder %s457, %s473
      %p475 = scmp.eq.s32.totalorder %s31, 0
      %p476 = por %p474, %p475
      %p477 = scmp.le.s32.totalorder 1, %s25
      %p478 = scmp.lt.s32.totalorder %s25, 5
      %p479 = pnand %p477, %p478
      %p480 = pneg %p479
      // Predicated region
      $region9: #{bert_forward.1} parent=5 // pred_check
        _
      $region10: #{bert_forward.1} parent=5 // pred_check_branch
        %482 = sbr.rel (%p479) target = $region12
      $region11: #{bert_forward.1} parent=5 // pred_region
        %s483 = ssub.s32 %s25, 1
        // Predicated region
        $region13: #{bert_forward.1} parent=11 // pred_check
          %p484 = pneg %p110
        $region14: #{bert_forward.1} parent=11 // pred_check_branch
          %486 = sbr.rel (%p484) target = $region16
        $region15: #{bert_forward.1} parent=11 // pred_region
          _
        $region16: #{bert_forward.1} parent=11 // pred_fallthru
          _
        // Predicated region
        $region17: #{bert_forward.1} parent=11 // pred_check
          %p487 = pneg %p131
        $region18: #{bert_forward.1} parent=11 // pred_check_branch
          %489 = sbr.rel (%p487) target = $region20
        $region19: #{bert_forward.1} parent=11 // pred_region
          _
        $region20: #{bert_forward.1} parent=11 // pred_fallthru
          _
      $region12: #{bert_forward.1} parent=5 // pred_fallthru
        _
      %p490 = scmp.lt.s32.totalorder %s25, 4
      // Predicated region
      $region21: #{bert_forward.1} parent=5 // pred_check
        %p491 = pneg %p490
      $region22: #{bert_forward.1} parent=5 // pred_check_branch
        %493 = sbr.rel (%p491) target = $region24
      $region23: #{bert_forward.1} parent=5 // pred_region
        // Predicated region
        $region25: #{bert_forward.1} parent=23 // pred_check
          %p494 = pneg %p57
        $region26: #{bert_forward.1} parent=23 // pred_check_branch
          %496 = sbr.rel (%p494) target = $region28
        $region27: #{bert_forward.1} parent=23 // pred_region
          %p497 = scmp.lt.s32.totalorder %s32, 1
          %s498 = scalar_select %p497, %s32, 1
          %s499 = smul.addr %s498, 8
          %s500 = scalar_lea.vmem %s0, %s499
        $region28: #{bert_forward.1} parent=23 // pred_fallthru
          _
        // Predicated region
        $region29: #{bert_forward.1} parent=23 // pred_check
          %p501 = pneg %p83
        $region30: #{bert_forward.1} parent=23 // pred_check_branch
          %503 = sbr.rel (%p501) target = $region32
        $region31: #{bert_forward.1} parent=23 // pred_region
          %p504 = scmp.lt.s32.totalorder %s32, 1
          %s505 = scalar_select %p504, %s32, 1
          %s506 = scalar_lea.vmem %s1, %s505
        $region32: #{bert_forward.1} parent=23 // pred_fallthru
          _
        // Predicated region
        $region33: #{bert_forward.1} parent=23 // pred_check
          %p507 = pneg %p151
        $region34: #{bert_forward.1} parent=23 // pred_check_branch
          %509 = sbr.rel (%p507) target = $region36
        $region35: #{bert_forward.1} parent=23 // pred_region
          %p510 = scmp.lt.s32.totalorder %s33, 1
          %s511 = scalar_select %p510, %s33, 1
          %s512 = smul.addr %s511, 4
          %s513 = smul.addr %s512, 4
          %s514 = scalar_lea.vmem %s4, %s513
        $region36: #{bert_forward.1} parent=23 // pred_fallthru
          _
        // Predicated region
        $region37: #{bert_forward.1} parent=23 // pred_check
          %p515 = pneg %p177
        $region38: #{bert_forward.1} parent=23 // pred_check_branch
          %517 = sbr.rel (%p515) target = $region40
        $region39: #{bert_forward.1} parent=23 // pred_region
          %p518 = scmp.lt.s32.totalorder %s33, 1
          %s519 = scalar_select %p518, %s33, 1
          %s520 = scalar_lea.vmem %s5, %s519
        $region40: #{bert_forward.1} parent=23 // pred_fallthru
          _
        // Predicated region
        $region41: #{bert_forward.1} parent=23 // pred_check
          %p521 = pneg %p203
        $region42: #{bert_forward.1} parent=23 // pred_check_branch
          %523 = sbr.rel (%p521) target = $region44
        $region43: #{bert_forward.1} parent=23 // pred_region
          %p524 = scmp.lt.s32.totalorder %s33, 1
          %s525 = scalar_select %p524, %s33, 1
          %s526 = smul.addr %s525, 4
          %s527 = smul.addr %s526, 4
          %s528 = scalar_lea.vmem %s6, %s527
        $region44: #{bert_forward.1} parent=23 // pred_fallthru
          _
        // Predicated region
        $region45: #{bert_forward.1} parent=23 // pred_check
          %p529 = pneg %p229
        $region46: #{bert_forward.1} parent=23 // pred_check_branch
          %531 = sbr.rel (%p529) target = $region48
        $region47: #{bert_forward.1} parent=23 // pred_region
          %p532 = scmp.lt.s32.totalorder %s33, 1
          %s533 = scalar_select %p532, %s33, 1
          %s534 = scalar_lea.vmem %s7, %s533
        $region48: #{bert_forward.1} parent=23 // pred_fallthru
          _
        // Predicated region
        $region49: #{bert_forward.1} parent=23 // pred_check
          %p535 = pneg %p255
        $region50: #{bert_forward.1} parent=23 // pred_check_branch
          %537 = sbr.rel (%p535) target = $region52
        $region51: #{bert_forward.1} parent=23 // pred_region
          %p538 = scmp.lt.s32.totalorder %s33, 1
          %s539 = scalar_select %p538, %s33, 1
          %s540 = scalar_lea.vmem %s8, %s539
        $region52: #{bert_forward.1} parent=23 // pred_fallthru
          _
        // Predicated region
        $region53: #{bert_forward.1} parent=23 // pred_check
          %p541 = pneg %p281
        $region54: #{bert_forward.1} parent=23 // pred_check_branch
          %543 = sbr.rel (%p541) target = $region56
        $region55: #{bert_forward.1} parent=23 // pred_region
          %p544 = scmp.lt.s32.totalorder %s33, 1
          %s545 = scalar_select %p544, %s33, 1
          %s546 = scalar_lea.vmem %s9, %s545
        $region56: #{bert_forward.1} parent=23 // pred_fallthru
          _
        // Predicated region
        $region57: #{bert_forward.1} parent=23 // pred_check
          %p547 = pneg %p307
        $region58: #{bert_forward.1} parent=23 // pred_check_branch
          %549 = sbr.rel (%p547) target = $region60
        $region59: #{bert_forward.1} parent=23 // pred_region
          %p550 = scmp.lt.s32.totalorder %s33, 1
          %s551 = scalar_select %p550, %s33, 1
          %s552 = smul.addr %s551, 4
          %s553 = smul.addr %s552, 4
          %s554 = scalar_lea.vmem %s10, %s553
        $region60: #{bert_forward.1} parent=23 // pred_fallthru
          _
        // Predicated region
        $region61: #{bert_forward.1} parent=23 // pred_check
          %p555 = pneg %p333
        $region62: #{bert_forward.1} parent=23 // pred_check_branch
          %557 = sbr.rel (%p555) target = $region64
        $region63: #{bert_forward.1} parent=23 // pred_region
          %p558 = scmp.lt.s32.totalorder %s33, 1
          %s559 = scalar_select %p558, %s33, 1
          %s560 = scalar_lea.vmem %s11, %s559
        $region64: #{bert_forward.1} parent=23 // pred_fallthru
          _
        // Predicated region
        $region65: #{bert_forward.1} parent=23 // pred_check
          %p561 = pneg %p359
        $region66: #{bert_forward.1} parent=23 // pred_check_branch
          %563 = sbr.rel (%p561) target = $region68
        $region67: #{bert_forward.1} parent=23 // pred_region
          %p564 = scmp.lt.s32.totalorder %s33, 1
          %s565 = scalar_select %p564, %s33, 1
          %s566 = smul.addr %s565, 16
          %s567 = smul.addr %s566, 4
          %s568 = scalar_lea.vmem %s12, %s567
        $region68: #{bert_forward.1} parent=23 // pred_fallthru
          _
        // Predicated region
        $region69: #{bert_forward.1} parent=23 // pred_check
          %p569 = pneg %p385
        $region70: #{bert_forward.1} parent=23 // pred_check_branch
          %571 = sbr.rel (%p569) target = $region72
        $region71: #{bert_forward.1} parent=23 // pred_region
          %p572 = scmp.lt.s32.totalorder %s33, 1
          %s573 = scalar_select %p572, %s33, 1
          %s574 = scalar_lea.vmem %s13, %s573
        $region72: #{bert_forward.1} parent=23 // pred_fallthru
          _
        // Predicated region
        $region73: #{bert_forward.1} parent=23 // pred_check
          %p575 = pneg %p411
        $region74: #{bert_forward.1} parent=23 // pred_check_branch
          %577 = sbr.rel (%p575) target = $region76
        $region75: #{bert_forward.1} parent=23 // pred_region
          %p578 = scmp.lt.s32.totalorder %s33, 1
          %s579 = scalar_select %p578, %s33, 1
          %s580 = scalar_lea.vmem %s14, %s579
        $region76: #{bert_forward.1} parent=23 // pred_fallthru
          _
        // Predicated region
        $region77: #{bert_forward.1} parent=23 // pred_check
          %p581 = pneg %p437
        $region78: #{bert_forward.1} parent=23 // pred_check_branch
          %583 = sbr.rel (%p581) target = $region80
        $region79: #{bert_forward.1} parent=23 // pred_region
          %p584 = scmp.lt.s32.totalorder %s33, 1
          %s585 = scalar_select %p584, %s33, 1
          %s586 = scalar_lea.vmem %s15, %s585
        $region80: #{bert_forward.1} parent=23 // pred_fallthru
          _
      $region24: #{bert_forward.1} parent=5 // pred_fallthru
        _
      %p587 = scmp.le.s32.totalorder 1, %s25
      %p588 = scmp.lt.s32.totalorder %s25, 5
      %p589 = pnand %p587, %p588
      %p590 = pneg %p589
      // Predicated region
      $region81: #{bert_forward.1} parent=5 // pred_check
        _
      $region82: #{bert_forward.1} parent=5 // pred_check_branch
        %592 = sbr.rel (%p589) target = $region84
      $region83: #{bert_forward.1} parent=5 // pred_region
        %s593 = ssub.s32 %s25, 1
        %p594 = scmp.lt.s32.totalorder %s34, 1
        %s595 = scalar_select %p594, %s34, 1
        %s596 = smul.addr %s595, 8
        %s597 = scalar_lea.vmem %s0, %s596
        %p598 = pneg %p63
        %p599 = pneg %p60
        %p600 = scmp.lt.s32.totalorder %s34, 1
        %s601 = scalar_select %p600, %s34, 1
        %s602 = scalar_lea.vmem %s1, %s601
        %p603 = pneg %p89
        %p604 = pneg %p86
        %p605 = pneg %p110
        %p606 = pneg %p107
        %p607 = pneg %p131
        %p608 = pneg %p128
        %p609 = scmp.lt.s32.totalorder %s35, 1
        %s610 = scalar_select %p609, %s35, 1
        %s611 = smul.addr %s610, 4
        %s612 = smul.addr %s611, 4
        %s613 = scalar_lea.vmem %s4, %s612
        %p614 = pneg %p157
        %p615 = pneg %p154
        %p616 = scmp.lt.s32.totalorder %s35, 1
        %s617 = scalar_select %p616, %s35, 1
        %s618 = scalar_lea.vmem %s5, %s617
        %p619 = pneg %p183
        %p620 = pneg %p180
        %p621 = scmp.lt.s32.totalorder %s35, 1
        %s622 = scalar_select %p621, %s35, 1
        %s623 = smul.addr %s622, 4
        %s624 = smul.addr %s623, 4
        %s625 = scalar_lea.vmem %s6, %s624
        %p626 = pneg %p209
        %p627 = pneg %p206
        %p628 = scmp.lt.s32.totalorder %s35, 1
        %s629 = scalar_select %p628, %s35, 1
        %s630 = scalar_lea.vmem %s7, %s629
        %p631 = pneg %p235
        %p632 = pneg %p232
        %p633 = scmp.lt.s32.totalorder %s35, 1
        %s634 = scalar_select %p633, %s35, 1
        %s635 = scalar_lea.vmem %s8, %s634
        %p636 = pneg %p261
        %p637 = pneg %p258
        %p638 = scmp.lt.s32.totalorder %s35, 1
        %s639 = scalar_select %p638, %s35, 1
        %s640 = scalar_lea.vmem %s9, %s639
        %p641 = pneg %p287
        %p642 = pneg %p284
        %p643 = scmp.lt.s32.totalorder %s35, 1
        %s644 = scalar_select %p643, %s35, 1
        %s645 = smul.addr %s644, 4
        %s646 = smul.addr %s645, 4
        %s647 = scalar_lea.vmem %s10, %s646
        %p648 = pneg %p313
        %p649 = pneg %p310
        %p650 = scmp.lt.s32.totalorder %s35, 1
        %s651 = scalar_select %p650, %s35, 1
        %s652 = scalar_lea.vmem %s11, %s651
        %p653 = pneg %p339
        %p654 = pneg %p336
        %p655 = scmp.lt.s32.totalorder %s35, 1
        %s656 = scalar_select %p655, %s35, 1
        %s657 = smul.addr %s656, 16
        %s658 = smul.addr %s657, 4
        %s659 = scalar_lea.vmem %s12, %s658
        %p660 = pneg %p365
        %p661 = pneg %p362
        %p662 = scmp.lt.s32.totalorder %s35, 1
        %s663 = scalar_select %p662, %s35, 1
        %s664 = scalar_lea.vmem %s13, %s663
        %p665 = pneg %p391
        %p666 = pneg %p388
        %p667 = scmp.lt.s32.totalorder %s35, 1
        %s668 = scalar_select %p667, %s35, 1
        %s669 = scalar_lea.vmem %s14, %s668
        %p670 = pneg %p417
        %p671 = pneg %p414
        %p672 = scmp.lt.s32.totalorder %s35, 1
        %s673 = scalar_select %p672, %s35, 1
        %s674 = scalar_lea.vmem %s15, %s673
        %p675 = pneg %p443
        %p676 = pneg %p440
        %p677 = pneg %p469
        %p678 = pneg %p466
        %s679 = sand.u32 %s456, 1
        %s680 = scalar_lea.sflag [#allocation6], %s679
        %s681 = sand.u32 %s456, 1
        %s682 = scalar_lea.vmem [#allocation5], %s681
        %p683 = scmp.lt.s32.totalorder %s34, 1
        %s684 = scalar_select %p683, %s34, 1
        %s685 = smul.addr %s684, 8
        %s686 = scalar_lea.vmem %s0, %s685
        %p687 = scmp.lt.s32.totalorder %s34, 1
        %s688 = scalar_select %p687, %s34, 1
        %s689 = scalar_lea.vmem %s1, %s688
        %p690 = scmp.lt.s32.totalorder %s35, 1
        %s691 = scalar_select %p690, %s35, 1
        %s692 = smul.addr %s691, 4
        %s693 = smul.addr %s692, 4
        %s694 = scalar_lea.vmem %s4, %s693
        %p695 = scmp.lt.s32.totalorder %s35, 1
        %s696 = scalar_select %p695, %s35, 1
        %s697 = scalar_lea.vmem %s5, %s696
        %p698 = scmp.lt.s32.totalorder %s35, 1
        %s699 = scalar_select %p698, %s35, 1
        %s700 = smul.addr %s699, 4
        %s701 = smul.addr %s700, 4
        %s702 = scalar_lea.vmem %s6, %s701
        %p703 = scmp.lt.s32.totalorder %s35, 1
        %s704 = scalar_select %p703, %s35, 1
        %s705 = scalar_lea.vmem %s7, %s704
        %p706 = scmp.lt.s32.totalorder %s35, 1
        %s707 = scalar_select %p706, %s35, 1
        %s708 = scalar_lea.vmem %s8, %s707
        %p709 = scmp.lt.s32.totalorder %s35, 1
        %s710 = scalar_select %p709, %s35, 1
        %s711 = scalar_lea.vmem %s9, %s710
        %p712 = scmp.lt.s32.totalorder %s35, 1
        %s713 = scalar_select %p712, %s35, 1
        %s714 = smul.addr %s713, 4
        %s715 = smul.addr %s714, 4
        %s716 = scalar_lea.vmem %s10, %s715
        %p717 = scmp.lt.s32.totalorder %s35, 1
        %s718 = scalar_select %p717, %s35, 1
        %s719 = scalar_lea.vmem %s11, %s718
        %p720 = scmp.lt.s32.totalorder %s35, 1
        %s721 = scalar_select %p720, %s35, 1
        %s722 = smul.addr %s721, 16
        %s723 = smul.addr %s722, 4
        %s724 = scalar_lea.vmem %s12, %s723
        %p725 = scmp.lt.s32.totalorder %s35, 1
        %s726 = scalar_select %p725, %s35, 1
        %s727 = scalar_lea.vmem %s13, %s726
        %p728 = scmp.lt.s32.totalorder %s35, 1
        %s729 = scalar_select %p728, %s35, 1
        %s730 = scalar_lea.vmem %s14, %s729
        %p731 = scmp.lt.s32.totalorder %s35, 1
        %s732 = scalar_select %p731, %s35, 1
        %s733 = scalar_lea.vmem %s15, %s732
        %p735 = scmp.eq.s32.totalorder %s35, 0
        // Predicated region
        $region85: #{bert_forward.1} parent=83 // pred_check
          %p736 = pneg %p735
        $region86: #{bert_forward.1} parent=83 // pred_check_branch
          %738 = sbr.rel (%p736) target = $region88
        $region87: #{bert_forward.1} parent=83 // pred_region
          %v739 = vld [vmem:[%s686] sm:$0xff]
          %v740 = vld [vmem:[%s2] sm:$0x1]
          %v741 = vld [vmem:[%s3] sm:$0x1]
          %vm742 = vcmask 261120
          %v743 = vsel %vm742, %v739, 0.0
          %744 = vadd.xlane.f32.xlu0 %v743
          %v745 = vpop.xlane.xlu0 %744
          %v746 = vrcp.pop 32.0
          %v747 = vmul.f32 %v745, %v746
          %v748 = vsub.f32 %v739, %v747
          %v749 = vmul.f32 %v748, %v748
          %v750 = vsel %vm742, %v749, 0.0
          %751 = vadd.xlane.f32.xlu0 %v750
          %v752 = vpop.xlane.xlu0 %751
          %v753 = vmul.f32 %v752, %v746
          %v754 = vadd.f32 %v753, 1e-12
          %v755 = vrsqrt.pop %v754
          %v756 = vmul.f32 %v748, %v755
          %v758 = vlaneseq
          %v759 = vshrl.u32 %v758, 7
          %v760 = vsub.s32 0, %v759
          %v761 = vrot.slane %v740, %v760
          %v763 = vmul.f32 %v756, %v761
          %v765 = vlaneseq
          %v766 = vshrl.u32 %v765, 7
          %v767 = vsub.s32 0, %v766
          %v768 = vrot.slane %v741, %v767
          %v770 = vadd.f32 %v763, %v768
          %771 = vst.msk [vmem:[#allocation2] sm:$0xff] %vm742, %v770
        $region88: #{bert_forward.1} parent=83 // pred_fallthru
          _
        %v772 = vld [vmem:[#allocation2] sm:$0xff]
        %v773 = vpack.c.bf16 %v772, %v772
        %v774 = vld [vmem:[%s694] sm:$0xf]
        %v775 = vld [vmem:[%s694 + $0x4] sm:$0xf]
        %v776 = vld [vmem:[%s694 + $0x8] sm:$0xf]
        %v777 = vld [vmem:[%s694 + $0xc] sm:$0xf]
        %v778 = vld [vmem:[%s697] sm:$0x1]
        %v780 = vlaneseq
        %v781 = vshrl.u32 %v780, 7
        %v782 = vsub.s32 0, %v781
        %v783 = vrot.slane %v778, %v782
        %v789 = vunpack.c.l.b16 %v774
        %v790 = vunpack.c.l.b16 %v775
        %v791 = vunpack.c.l.b16 %v776
        %v792 = vunpack.c.l.b16 %v777
        %v793 = vpack.c.b16 %v790, %v789
        %v794 = vpack.c.b16 %v792, %v791
        %vm797 = vcmask 261120
        %v799 = vsel %vm797, %v773, 0
        %801 = vmatprep.subr.bf16.mxu0 0
        %802 = vmatpush1.bf16.msra.mxu0 %v793
        %803 = vmatprep.subr.bf16.mxu0 0
        %804 = vmatpush1.bf16.msra.mxu0 %v794
        %805 = vmatprep.subr.bf16.mxu0 0
        %806 = vmatpush1.bf16.msra.mxu0 0
        %807 = vmatprep.subr.bf16.mxu0 0
        %808 = vmatpush1.bf16.msra.mxu0 0
        %809 = vmatprep.subr.bf16.mxu0 0
        %810 = vmatpush1.bf16.msra.mxu0 0
        %811 = vmatprep.subr.bf16.mxu0 0
        %812 = vmatpush1.bf16.msra.mxu0 0
        %813 = vmatprep.subr.bf16.mxu0 0
        %814 = vmatpush1.bf16.msra.mxu0 0
        %815 = vmatprep.subr.bf16.mxu0 0
        %816 = vmatpush1.bf16.msra.mxu0 0
        %817 = vmatprep.subr.bf16.mxu0 0
        %818 = vmatpush1.bf16.msra.mxu0 0
        %819 = vmatprep.subr.bf16.mxu0 0
        %820 = vmatpush1.bf16.msra.mxu0 0
        %821 = vmatprep.subr.bf16.mxu0 0
        %822 = vmatpush1.bf16.msra.mxu0 0
        %823 = vmatprep.subr.bf16.mxu0 0
        %824 = vmatpush1.bf16.msra.mxu0 0
        %825 = vmatprep.subr.bf16.mxu0 0
        %826 = vmatpush1.bf16.msra.mxu0 0
        %827 = vmatprep.subr.bf16.mxu0 0
        %828 = vmatpush1.bf16.msra.mxu0 0
        %829 = vmatprep.subr.bf16.mxu0 0
        %830 = vmatpush1.bf16.msra.mxu0 0
        %831 = vmatprep.subr.bf16.mxu0 0
        %832 = vmatpush1.bf16.msra.mxu0 0
        %833 = vmatprep.mubr.bf16.mxu0 0
        %834 = vmatmul.mubr.bf16.gmra.mrb[0].mxu0 %v799
        %v835 = vpop.f32.mrb[0].mxu0
        %v836 = vadd.f32 %v783, %v835
        %v837 = vpop.f32.mrb[0].mxu0
        %v838 = vpop.f32.mrb[0].mxu0
        %v839 = vpop.f32.mrb[0].mxu0
        %840 = vdwg.mxu0
        %vm841 = vcmask 195584
        %842 = vst.msk [vmem:[#allocation3] sm:$0xff] %vm841, %v836
        %844 = vrot.lane.b32.xlu0 %v836, 104
        %v845 = vpop.permute.xlu0 %844
        %s847 = scalar_lea.vmem [#allocation3], 8
        %848 = vst.msk [vmem:[%s847] sm:$0xff] %vm841, %v845
        %849 = vrot.lane.b32.xlu0 %v836, 80
        %v850 = vpop.permute.xlu0 %849
        %s852 = scalar_lea.vmem [#allocation3], 16
        %853 = vst.msk [vmem:[%s852] sm:$0xff] %vm841, %v850
        %854 = vrot.lane.b32.xlu0 %v836, 56
        %v855 = vpop.permute.xlu0 %854
        %s857 = scalar_lea.vmem [#allocation3], 24
        %858 = vst.msk [vmem:[%s857] sm:$0xff] %vm841, %v855
        %v859 = vld [vmem:[#allocation3] sm:$0xff]
        %v860 = vld [vmem:[#allocation3 + $0x8] sm:$0xff]
        %v861 = vld [vmem:[#allocation3 + $0x10] sm:$0xff]
        %v862 = vld [vmem:[#allocation3 + $0x18] sm:$0xff]
        %v863 = vpack.c.bf16 %v859, %v859
        %v864 = vpack.c.bf16 %v860, %v860
        %v865 = vpack.c.bf16 %v861, %v861
        %v866 = vpack.c.bf16 %v862, %v862
        %v867 = vld [vmem:[%s689] sm:$0x1]
        %v869 = vlaneseq
        %v870 = vshrl.u32 %v869, 7
        %v871 = vsub.s32 0, %v870
        %v872 = vrot.slane %v867, %v871
        %875 = vrot.lane.b32.xlu0 %v863, 120
        %v876 = vpop.permute.xlu0 %875
        %vm877 = vcmask 64512
        %v879 = vsel %vm877, %v863, 0
        %v882 = vsel %vm877, %v876, 0
        %884 = vmatprep.subr.bf16.mxu0 0
        %885 = vmatpush1.bf16.xpose.msra.mxu0 %v882
        %886 = vmatprep.subr.bf16.mxu0 0
        %887 = vmatpush1.bf16.xpose.msra.mxu0 0
        %888 = vmatprep.subr.bf16.mxu0 0
        %889 = vmatpush1.bf16.xpose.msra.mxu0 0
        %890 = vmatprep.subr.bf16.mxu0 0
        %891 = vmatpush1.bf16.xpose.msra.mxu0 0
        %892 = vmatprep.subr.bf16.mxu0 0
        %893 = vmatpush1.bf16.xpose.msra.mxu0 0
        %894 = vmatprep.subr.bf16.mxu0 0
        %895 = vmatpush1.bf16.xpose.msra.mxu0 0
        %896 = vmatprep.subr.bf16.mxu0 0
        %897 = vmatpush1.bf16.xpose.msra.mxu0 0
        %898 = vmatprep.subr.bf16.mxu0 0
        %899 = vmatpush1.bf16.xpose.msra.mxu0 0
        %900 = vmatprep.subr.bf16.mxu0 0
        %901 = vmatpush1.bf16.xpose.msra.mxu0 0
        %902 = vmatprep.subr.bf16.mxu0 0
        %903 = vmatpush1.bf16.xpose.msra.mxu0 0
        %904 = vmatprep.subr.bf16.mxu0 0
        %905 = vmatpush1.bf16.xpose.msra.mxu0 0
        %906 = vmatprep.subr.bf16.mxu0 0
        %907 = vmatpush1.bf16.xpose.msra.mxu0 0
        %908 = vmatprep.subr.bf16.mxu0 0
        %909 = vmatpush1.bf16.xpose.msra.mxu0 0
        %910 = vmatprep.subr.bf16.mxu0 0
        %911 = vmatpush1.bf16.xpose.msra.mxu0 0
        %912 = vmatprep.subr.bf16.mxu0 0
        %913 = vmatpush1.bf16.xpose.msra.mxu0 0
        %914 = vmatprep.subr.bf16.mxu0 0
        %915 = vmatpush1.bf16.xpose.msra.mxu0 0
        %916 = vmatprep.mubr.bf16.mxu0 0
        %917 = vmatmul.mubr.bf16.gmra.mrb[0].mxu0 %v879
        %v918 = vpop.f32.mrb[0].mxu0
        %v919 = vadd.f32 %v872, %v918
        %v920 = vpop.f32.mrb[0].mxu0
        %v921 = vpop.f32.mrb[0].mxu0
        %v922 = vpop.f32.mrb[0].mxu0
        %923 = vdwg.mxu0
        %925 = vrot.lane.b32.xlu0 %v864, 120
        %v926 = vpop.permute.xlu0 %925
        %v928 = vsel %vm877, %v864, 0
        %v931 = vsel %vm877, %v926, 0
        %933 = vmatprep.subr.bf16.mxu0 0
        %934 = vmatpush1.bf16.xpose.msra.mxu0 %v931
        %935 = vmatprep.subr.bf16.mxu0 0
        %936 = vmatpush1.bf16.xpose.msra.mxu0 0
        %937 = vmatprep.subr.bf16.mxu0 0
        %938 = vmatpush1.bf16.xpose.msra.mxu0 0
        %939 = vmatprep.subr.bf16.mxu0 0
        %940 = vmatpush1.bf16.xpose.msra.mxu0 0
        %941 = vmatprep.subr.bf16.mxu0 0
        %942 = vmatpush1.bf16.xpose.msra.mxu0 0
        %943 = vmatprep.subr.bf16.mxu0 0
        %944 = vmatpush1.bf16.xpose.msra.mxu0 0
        %945 = vmatprep.subr.bf16.mxu0 0
        %946 = vmatpush1.bf16.xpose.msra.mxu0 0
        %947 = vmatprep.subr.bf16.mxu0 0
        %948 = vmatpush1.bf16.xpose.msra.mxu0 0
        %949 = vmatprep.subr.bf16.mxu0 0
        %950 = vmatpush1.bf16.xpose.msra.mxu0 0
        %951 = vmatprep.subr.bf16.mxu0 0
        %952 = vmatpush1.bf16.xpose.msra.mxu0 0
        %953 = vmatprep.subr.bf16.mxu0 0
        %954 = vmatpush1.bf16.xpose.msra.mxu0 0
        %955 = vmatprep.subr.bf16.mxu0 0
        %956 = vmatpush1.bf16.xpose.msra.mxu0 0
        %957 = vmatprep.subr.bf16.mxu0 0
        %958 = vmatpush1.bf16.xpose.msra.mxu0 0
        %959 = vmatprep.subr.bf16.mxu0 0
        %960 = vmatpush1.bf16.xpose.msra.mxu0 0
        %961 = vmatprep.subr.bf16.mxu0 0
        %962 = vmatpush1.bf16.xpose.msra.mxu0 0
        %963 = vmatprep.subr.bf16.mxu0 0
        %964 = vmatpush1.bf16.xpose.msra.mxu0 0
        %965 = vmatprep.mubr.bf16.mxu0 0
        %966 = vmatmul.mubr.bf16.gmra.mrb[0].mxu0 %v928
        %v967 = vpop.f32.mrb[0].mxu0
        %v968 = vadd.f32 %v872, %v967
        %v969 = vpop.f32.mrb[0].mxu0
        %v970 = vpop.f32.mrb[0].mxu0
        %v971 = vpop.f32.mrb[0].mxu0
        %972 = vdwg.mxu0
        %974 = vrot.lane.b32.xlu0 %v865, 120
        %v975 = vpop.permute.xlu0 %974
        %v977 = vsel %vm877, %v865, 0
        %v980 = vsel %vm877, %v975, 0
        %982 = vmatprep.subr.bf16.mxu0 0
        %983 = vmatpush1.bf16.xpose.msra.mxu0 %v980
        %984 = vmatprep.subr.bf16.mxu0 0
        %985 = vmatpush1.bf16.xpose.msra.mxu0 0
        %986 = vmatprep.subr.bf16.mxu0 0
        %987 = vmatpush1.bf16.xpose.msra.mxu0 0
        %988 = vmatprep.subr.bf16.mxu0 0
        %989 = vmatpush1.bf16.xpose.msra.mxu0 0
        %990 = vmatprep.subr.bf16.mxu0 0
        %991 = vmatpush1.bf16.xpose.msra.mxu0 0
        %992 = vmatprep.subr.bf16.mxu0 0
        %993 = vmatpush1.bf16.xpose.msra.mxu0 0
        %994 = vmatprep.subr.bf16.mxu0 0
        %995 = vmatpush1.bf16.xpose.msra.mxu0 0
        %996 = vmatprep.subr.bf16.mxu0 0
        %997 = vmatpush1.bf16.xpose.msra.mxu0 0
        %998 = vmatprep.subr.bf16.mxu0 0
        %999 = vmatpush1.bf16.xpose.msra.mxu0 0
        %1000 = vmatprep.subr.bf16.mxu0 0
        %1001 = vmatpush1.bf16.xpose.msra.mxu0 0
        %1002 = vmatprep.subr.bf16.mxu0 0
        %1003 = vmatpush1.bf16.xpose.msra.mxu0 0
        %1004 = vmatprep.subr.bf16.mxu0 0
        %1005 = vmatpush1.bf16.xpose.msra.mxu0 0
        %1006 = vmatprep.subr.bf16.mxu0 0
        %1007 = vmatpush1.bf16.xpose.msra.mxu0 0
        %1008 = vmatprep.subr.bf16.mxu0 0
        %1009 = vmatpush1.bf16.xpose.msra.mxu0 0
        %1010 = vmatprep.subr.bf16.mxu0 0
        %1011 = vmatpush1.bf16.xpose.msra.mxu0 0
        %1012 = vmatprep.subr.bf16.mxu0 0
        %1013 = vmatpush1.bf16.xpose.msra.mxu0 0
        %1014 = vmatprep.mubr.bf16.mxu0 0
        %1015 = vmatmul.mubr.bf16.gmra.mrb[0].mxu0 %v977
        %v1016 = vpop.f32.mrb[0].mxu0
        %v1017 = vadd.f32 %v872, %v1016
        %v1018 = vpop.f32.mrb[0].mxu0
        %v1019 = vpop.f32.mrb[0].mxu0
        %v1020 = vpop.f32.mrb[0].mxu0
        %1021 = vdwg.mxu0
        %1023 = vrot.lane.b32.xlu0 %v866, 120
        %v1024 = vpop.permute.xlu0 %1023
        %v1026 = vsel %vm877, %v866, 0
        %v1029 = vsel %vm877, %v1024, 0
        %1031 = vmatprep.subr.bf16.mxu0 0
        %1032 = vmatpush1.bf16.xpose.msra.mxu0 %v1029
        %1033 = vmatprep.subr.bf16.mxu0 0
        %1034 = vmatpush1.bf16.xpose.msra.mxu0 0
        %1035 = vmatprep.subr.bf16.mxu0 0
        %1036 = vmatpush1.bf16.xpose.msra.mxu0 0
        %1037 = vmatprep.subr.bf16.mxu0 0
        %1038 = vmatpush1.bf16.xpose.msra.mxu0 0
        %1039 = vmatprep.subr.bf16.mxu0 0
        %1040 = vmatpush1.bf16.xpose.msra.mxu0 0
        %1041 = vmatprep.subr.bf16.mxu0 0
        %1042 = vmatpush1.bf16.xpose.msra.mxu0 0
        %1043 = vmatprep.subr.bf16.mxu0 0
        %1044 = vmatpush1.bf16.xpose.msra.mxu0 0
        %1045 = vmatprep.subr.bf16.mxu0 0
        %1046 = vmatpush1.bf16.xpose.msra.mxu0 0
        %1047 = vmatprep.subr.bf16.mxu0 0
        %1048 = vmatpush1.bf16.xpose.msra.mxu0 0
        %1049 = vmatprep.subr.bf16.mxu0 0
        %1050 = vmatpush1.bf16.xpose.msra.mxu0 0
        %1051 = vmatprep.subr.bf16.mxu0 0
        %1052 = vmatpush1.bf16.xpose.msra.mxu0 0
        %1053 = vmatprep.subr.bf16.mxu0 0
        %1054 = vmatpush1.bf16.xpose.msra.mxu0 0
        %1055 = vmatprep.subr.bf16.mxu0 0
        %1056 = vmatpush1.bf16.xpose.msra.mxu0 0
        %1057 = vmatprep.subr.bf16.mxu0 0
        %1058 = vmatpush1.bf16.xpose.msra.mxu0 0
        %1059 = vmatprep.subr.bf16.mxu0 0
        %1060 = vmatpush1.bf16.xpose.msra.mxu0 0
        %1061 = vmatprep.subr.bf16.mxu0 0
        %1062 = vmatpush1.bf16.xpose.msra.mxu0 0
        %1063 = vmatprep.mubr.bf16.mxu0 0
        %1064 = vmatmul.mubr.bf16.gmra.mrb[0].mxu0 %v1026
        %v1065 = vpop.f32.mrb[0].mxu0
        %v1066 = vadd.f32 %v872, %v1065
        %v1067 = vpop.f32.mrb[0].mxu0
        %v1068 = vpop.f32.mrb[0].mxu0
        %v1069 = vpop.f32.mrb[0].mxu0
        %1070 = vdwg.mxu0
        %v1071 = vsel %vm877, %v919, -inf
        %1072 = vmax.xlane.f32.xlu0 %v1071
        %v1073 = vpop.xlane.xlu0 %1072
        %v1074 = vsel %vm877, %v968, -inf
        %1075 = vmax.xlane.f32.xlu0 %v1074
        %v1076 = vpop.xlane.xlu0 %1075
        %v1077 = vsel %vm877, %v1017, -inf
        %1078 = vmax.xlane.f32.xlu0 %v1077
        %v1079 = vpop.xlane.xlu0 %1078
        %v1080 = vsel %vm877, %v1066, -inf
        %1081 = vmax.xlane.f32.xlu0 %v1080
        %v1082 = vpop.xlane.xlu0 %1081
        %v1083 = vsub.f32 %v919, %v1073
        %v1084 = vsub.f32 %v968, %v1076
        %v1085 = vsub.f32 %v1017, %v1079
        %v1086 = vsub.f32 %v1066, %v1082
        %v1087 = vmul.f32 %v1083, 1.442695
        %v1088 = vpow.pop %v1087
        %v1089 = vmul.f32 %v1084, 1.442695
        %v1090 = vpow.pop %v1089
        %v1091 = vmul.f32 %v1085, 1.442695
        %v1092 = vpow.pop %v1091
        %v1093 = vmul.f32 %v1086, 1.442695
        %v1094 = vpow.pop %v1093
        %v1095 = vsel %vm877, %v1088, 0.0
        %1096 = vadd.xlane.f32.xlu0 %v1095
        %v1097 = vpop.xlane.xlu0 %1096
        %v1098 = vsel %vm877, %v1090, 0.0
        %1099 = vadd.xlane.f32.xlu0 %v1098
        %v1100 = vpop.xlane.xlu0 %1099
        %v1101 = vsel %vm877, %v1092, 0.0
        %1102 = vadd.xlane.f32.xlu0 %v1101
        %v1103 = vpop.xlane.xlu0 %1102
        %v1104 = vsel %vm877, %v1094, 0.0
        %1105 = vadd.xlane.f32.xlu0 %v1104
        %v1106 = vpop.xlane.xlu0 %1105
        %v1107 = vrcp.pop %v1097
        %v1108 = vrcp.pop %v1100
        %v1109 = vrcp.pop %v1103
        %v1110 = vrcp.pop %v1106
        %v1111 = vmul.f32 %v1088, %v1107
        %v1112 = vmul.f32 %v1090, %v1108
        %v1113 = vmul.f32 %v1092, %v1109
        %v1114 = vmul.f32 %v1094, %v1110
        %v1115 = vpack.c.bf16 %v1111, %v1111
        %v1116 = vpack.c.bf16 %v1112, %v1112
        %v1117 = vpack.c.bf16 %v1113, %v1113
        %v1118 = vpack.c.bf16 %v1114, %v1114
        %1119 = vrot.lane.b32.xlu0 %v863, 112
        %v1120 = vpop.permute.xlu0 %1119
        %v1122 = vsel %vm877, %v1115, 0
        %vm1124 = vcmask 1043456
        %v1126 = vsel %vm1124, %v1120, 0
        %1128 = vmatprep.subr.bf16.mxu0 0
        %1129 = vmatpush1.bf16.msra.mxu0 %v1126
        %1130 = vmatprep.subr.bf16.mxu0 0
        %1131 = vmatpush1.bf16.msra.mxu0 0
        %1132 = vmatprep.subr.bf16.mxu0 0
        %1133 = vmatpush1.bf16.msra.mxu0 0
        %1134 = vmatprep.subr.bf16.mxu0 0
        %1135 = vmatpush1.bf16.msra.mxu0 0
        %1136 = vmatprep.subr.bf16.mxu0 0
        %1137 = vmatpush1.bf16.msra.mxu0 0
        %1138 = vmatprep.subr.bf16.mxu0 0
        %1139 = vmatpush1.bf16.msra.mxu0 0
        %1140 = vmatprep.subr.bf16.mxu0 0
        %1141 = vmatpush1.bf16.msra.mxu0 0
        %1142 = vmatprep.subr.bf16.mxu0 0
        %1143 = vmatpush1.bf16.msra.mxu0 0
        %1144 = vmatprep.subr.bf16.mxu0 0
        %1145 = vmatpush1.bf16.msra.mxu0 0
        %1146 = vmatprep.subr.bf16.mxu0 0
        %1147 = vmatpush1.bf16.msra.mxu0 0
        %1148 = vmatprep.subr.bf16.mxu0 0
        %1149 = vmatpush1.bf16.msra.mxu0 0
        %1150 = vmatprep.subr.bf16.mxu0 0
        %1151 = vmatpush1.bf16.msra.mxu0 0
        %1152 = vmatprep.subr.bf16.mxu0 0
        %1153 = vmatpush1.bf16.msra.mxu0 0
        %1154 = vmatprep.subr.bf16.mxu0 0
        %1155 = vmatpush1.bf16.msra.mxu0 0
        %1156 = vmatprep.subr.bf16.mxu0 0
        %1157 = vmatpush1.bf16.msra.mxu0 0
        %1158 = vmatprep.subr.bf16.mxu0 0
        %1159 = vmatpush1.bf16.msra.mxu0 0
        %1160 = vmatprep.mubr.bf16.mxu0 0
        %1161 = vmatmul.mubr.bf16.gmra.mrb[0].mxu0 %v1122
        %v1162 = vpop.f32.mrb[0].mxu0
        %v1163 = vadd.f32 0.0, %v1162
        %v1164 = vpop.f32.mrb[0].mxu0
        %v1165 = vpop.f32.mrb[0].mxu0
        %v1166 = vpop.f32.mrb[0].mxu0
        %1167 = vdwg.mxu0
        %1168 = vrot.lane.b32.xlu0 %v864, 112
        %v1169 = vpop.permute.xlu0 %1168
        %v1171 = vsel %vm877, %v1116, 0
        %v1174 = vsel %vm1124, %v1169, 0
        %1176 = vmatprep.subr.bf16.mxu0 0
        %1177 = vmatpush1.bf16.msra.mxu0 %v1174
        %1178 = vmatprep.subr.bf16.mxu0 0
        %1179 = vmatpush1.bf16.msra.mxu0 0
        %1180 = vmatprep.subr.bf16.mxu0 0
        %1181 = vmatpush1.bf16.msra.mxu0 0
        %1182 = vmatprep.subr.bf16.mxu0 0
        %1183 = vmatpush1.bf16.msra.mxu0 0
        %1184 = vmatprep.subr.bf16.mxu0 0
        %1185 = vmatpush1.bf16.msra.mxu0 0
        %1186 = vmatprep.subr.bf16.mxu0 0
        %1187 = vmatpush1.bf16.msra.mxu0 0
        %1188 = vmatprep.subr.bf16.mxu0 0
        %1189 = vmatpush1.bf16.msra.mxu0 0
        %1190 = vmatprep.subr.bf16.mxu0 0
        %1191 = vmatpush1.bf16.msra.mxu0 0
        %1192 = vmatprep.subr.bf16.mxu0 0
        %1193 = vmatpush1.bf16.msra.mxu0 0
        %1194 = vmatprep.subr.bf16.mxu0 0
        %1195 = vmatpush1.bf16.msra.mxu0 0
        %1196 = vmatprep.subr.bf16.mxu0 0
        %1197 = vmatpush1.bf16.msra.mxu0 0
        %1198 = vmatprep.subr.bf16.mxu0 0
        %1199 = vmatpush1.bf16.msra.mxu0 0
        %1200 = vmatprep.subr.bf16.mxu0 0
        %1201 = vmatpush1.bf16.msra.mxu0 0
        %1202 = vmatprep.subr.bf16.mxu0 0
        %1203 = vmatpush1.bf16.msra.mxu0 0
        %1204 = vmatprep.subr.bf16.mxu0 0
        %1205 = vmatpush1.bf16.msra.mxu0 0
        %1206 = vmatprep.subr.bf16.mxu0 0
        %1207 = vmatpush1.bf16.msra.mxu0 0
        %1208 = vmatprep.mubr.bf16.mxu0 0
        %1209 = vmatmul.mubr.bf16.gmra.mrb[0].mxu0 %v1171
        %v1210 = vpop.f32.mrb[0].mxu0
        %v1211 = vadd.f32 0.0, %v1210
        %v1212 = vpop.f32.mrb[0].mxu0
        %v1213 = vpop.f32.mrb[0].mxu0
        %v1214 = vpop.f32.mrb[0].mxu0
        %1215 = vdwg.mxu0
        %1216 = vrot.lane.b32.xlu0 %v865, 112
        %v1217 = vpop.permute.xlu0 %1216
        %v1219 = vsel %vm877, %v1117, 0
        %v1222 = vsel %vm1124, %v1217, 0
        %1224 = vmatprep.subr.bf16.mxu0 0
        %1225 = vmatpush1.bf16.msra.mxu0 %v1222
        %1226 = vmatprep.subr.bf16.mxu0 0
        %1227 = vmatpush1.bf16.msra.mxu0 0
        %1228 = vmatprep.subr.bf16.mxu0 0
        %1229 = vmatpush1.bf16.msra.mxu0 0
        %1230 = vmatprep.subr.bf16.mxu0 0
        %1231 = vmatpush1.bf16.msra.mxu0 0
        %1232 = vmatprep.subr.bf16.mxu0 0
        %1233 = vmatpush1.bf16.msra.mxu0 0
        %1234 = vmatprep.subr.bf16.mxu0 0
        %1235 = vmatpush1.bf16.msra.mxu0 0
        %1236 = vmatprep.subr.bf16.mxu0 0
        %1237 = vmatpush1.bf16.msra.mxu0 0
        %1238 = vmatprep.subr.bf16.mxu0 0
        %1239 = vmatpush1.bf16.msra.mxu0 0
        %1240 = vmatprep.subr.bf16.mxu0 0
        %1241 = vmatpush1.bf16.msra.mxu0 0
        %1242 = vmatprep.subr.bf16.mxu0 0
        %1243 = vmatpush1.bf16.msra.mxu0 0
        %1244 = vmatprep.subr.bf16.mxu0 0
        %1245 = vmatpush1.bf16.msra.mxu0 0
        %1246 = vmatprep.subr.bf16.mxu0 0
        %1247 = vmatpush1.bf16.msra.mxu0 0
        %1248 = vmatprep.subr.bf16.mxu0 0
        %1249 = vmatpush1.bf16.msra.mxu0 0
        %1250 = vmatprep.subr.bf16.mxu0 0
        %1251 = vmatpush1.bf16.msra.mxu0 0
        %1252 = vmatprep.subr.bf16.mxu0 0
        %1253 = vmatpush1.bf16.msra.mxu0 0
        %1254 = vmatprep.subr.bf16.mxu0 0
        %1255 = vmatpush1.bf16.msra.mxu0 0
        %1256 = vmatprep.mubr.bf16.mxu0 0
        %1257 = vmatmul.mubr.bf16.gmra.mrb[0].mxu0 %v1219
        %v1258 = vpop.f32.mrb[0].mxu0
        %v1259 = vadd.f32 0.0, %v1258
        %v1260 = vpop.f32.mrb[0].mxu0
        %v1261 = vpop.f32.mrb[0].mxu0
        %v1262 = vpop.f32.mrb[0].mxu0
        %1263 = vdwg.mxu0
        %1264 = vrot.lane.b32.xlu0 %v866, 112
        %v1265 = vpop.permute.xlu0 %1264
        %v1267 = vsel %vm877, %v1118, 0
        %v1270 = vsel %vm1124, %v1265, 0
        %1272 = vmatprep.subr.bf16.mxu0 0
        %1273 = vmatpush1.bf16.msra.mxu0 %v1270
        %1274 = vmatprep.subr.bf16.mxu0 0
        %1275 = vmatpush1.bf16.msra.mxu0 0
        %1276 = vmatprep.subr.bf16.mxu0 0
        %1277 = vmatpush1.bf16.msra.mxu0 0
        %1278 = vmatprep.subr.bf16.mxu0 0
        %1279 = vmatpush1.bf16.msra.mxu0 0
        %1280 = vmatprep.subr.bf16.mxu0 0
        %1281 = vmatpush1.bf16.msra.mxu0 0
        %1282 = vmatprep.subr.bf16.mxu0 0
        %1283 = vmatpush1.bf16.msra.mxu0 0
        %1284 = vmatprep.subr.bf16.mxu0 0
        %1285 = vmatpush1.bf16.msra.mxu0 0
        %1286 = vmatprep.subr.bf16.mxu0 0
        %1287 = vmatpush1.bf16.msra.mxu0 0
        %1288 = vmatprep.subr.bf16.mxu0 0
        %1289 = vmatpush1.bf16.msra.mxu0 0
        %1290 = vmatprep.subr.bf16.mxu0 0
        %1291 = vmatpush1.bf16.msra.mxu0 0
        %1292 = vmatprep.subr.bf16.mxu0 0
        %1293 = vmatpush1.bf16.msra.mxu0 0
        %1294 = vmatprep.subr.bf16.mxu0 0
        %1295 = vmatpush1.bf16.msra.mxu0 0
        %1296 = vmatprep.subr.bf16.mxu0 0
        %1297 = vmatpush1.bf16.msra.mxu0 0
        %1298 = vmatprep.subr.bf16.mxu0 0
        %1299 = vmatpush1.bf16.msra.mxu0 0
        %1300 = vmatprep.subr.bf16.mxu0 0
        %1301 = vmatpush1.bf16.msra.mxu0 0
        %1302 = vmatprep.subr.bf16.mxu0 0
        %1303 = vmatpush1.bf16.msra.mxu0 0
        %1304 = vmatprep.mubr.bf16.mxu0 0
        %1305 = vmatmul.mubr.bf16.gmra.mrb[0].mxu0 %v1267
        %v1306 = vpop.f32.mrb[0].mxu0
        %v1307 = vadd.f32 0.0, %v1306
        %v1308 = vpop.f32.mrb[0].mxu0
        %v1309 = vpop.f32.mrb[0].mxu0
        %v1310 = vpop.f32.mrb[0].mxu0
        %1311 = vdwg.mxu0
        %1312 = vst.msk [vmem:[#allocation4] sm:$0xff] %vm877, %v1163
        %1314 = vrot.lane.b32.xlu0 %v1211, 8
        %v1315 = vpop.permute.xlu0 %1314
        %vm1317 = vcmask 130112
        %1318 = vst.msk [vmem:[#allocation4] sm:$0xff] %vm1317, %v1315
        %1320 = vrot.lane.b32.xlu0 %v1259, 16
        %v1321 = vpop.permute.xlu0 %1320
        %vm1323 = vcmask 195712
        %1324 = vst.msk [vmem:[#allocation4] sm:$0xff] %vm1323, %v1321
        %1326 = vrot.lane.b32.xlu0 %v1307, 24
        %v1327 = vpop.permute.xlu0 %1326
        %vm1329 = vcmask 261312
        %1330 = vst.msk [vmem:[#allocation4] sm:$0xff] %vm1329, %v1327
        %v1331 = vld [vmem:[#allocation4] sm:$0xff]
        %v1332 = vpack.c.bf16 %v1331, %v1331
        %v1333 = vld [vmem:[%s702] sm:$0xf]
        %v1334 = vld [vmem:[%s702 + $0x4] sm:$0xf]
        %v1335 = vld [vmem:[%s702 + $0x8] sm:$0xf]
        %v1336 = vld [vmem:[%s702 + $0xc] sm:$0xf]
        %v1337 = vld [vmem:[%s705] sm:$0x1]
        %v1339 = vlaneseq
        %v1340 = vshrl.u32 %v1339, 7
        %v1341 = vsub.s32 0, %v1340
        %v1342 = vrot.slane %v1337, %v1341
        %v1348 = vunpack.c.l.b16 %v1333
        %v1349 = vunpack.c.l.b16 %v1334
        %v1350 = vunpack.c.l.b16 %v1335
        %v1351 = vunpack.c.l.b16 %v1336
        %v1352 = vpack.c.b16 %v1349, %v1348
        %v1353 = vpack.c.b16 %v1351, %v1350
        %v1357 = vsel %vm797, %v1332, 0
        %1359 = vmatprep.subr.bf16.mxu0 0
        %1360 = vmatpush1.bf16.msra.mxu0 %v1352
        %1361 = vmatprep.subr.bf16.mxu0 0
        %1362 = vmatpush1.bf16.msra.mxu0 %v1353
        %1363 = vmatprep.subr.bf16.mxu0 0
        %1364 = vmatpush1.bf16.msra.mxu0 0
        %1365 = vmatprep.subr.bf16.mxu0 0
        %1366 = vmatpush1.bf16.msra.mxu0 0
        %1367 = vmatprep.subr.bf16.mxu0 0
        %1368 = vmatpush1.bf16.msra.mxu0 0
        %1369 = vmatprep.subr.bf16.mxu0 0
        %1370 = vmatpush1.bf16.msra.mxu0 0
        %1371 = vmatprep.subr.bf16.mxu0 0
        %1372 = vmatpush1.bf16.msra.mxu0 0
        %1373 = vmatprep.subr.bf16.mxu0 0
        %1374 = vmatpush1.bf16.msra.mxu0 0
        %1375 = vmatprep.subr.bf16.mxu0 0
        %1376 = vmatpush1.bf16.msra.mxu0 0
        %1377 = vmatprep.subr.bf16.mxu0 0
        %1378 = vmatpush1.bf16.msra.mxu0 0
        %1379 = vmatprep.subr.bf16.mxu0 0
        %1380 = vmatpush1.bf16.msra.mxu0 0
        %1381 = vmatprep.subr.bf16.mxu0 0
        %1382 = vmatpush1.bf16.msra.mxu0 0
        %1383 = vmatprep.subr.bf16.mxu0 0
        %1384 = vmatpush1.bf16.msra.mxu0 0
        %1385 = vmatprep.subr.bf16.mxu0 0
        %1386 = vmatpush1.bf16.msra.mxu0 0
        %1387 = vmatprep.subr.bf16.mxu0 0
        %1388 = vmatpush1.bf16.msra.mxu0 0
        %1389 = vmatprep.subr.bf16.mxu0 0
        %1390 = vmatpush1.bf16.msra.mxu0 0
        %1391 = vmatprep.mubr.bf16.mxu0 0
        %1392 = vmatmul.mubr.bf16.gmra.mrb[0].mxu0 %v1357
        %v1393 = vpop.f32.mrb[0].mxu0
        %v1394 = vadd.f32 %v1342, %v1393
        %v1395 = vpop.f32.mrb[0].mxu0
        %v1396 = vpop.f32.mrb[0].mxu0
        %v1397 = vpop.f32.mrb[0].mxu0
        %1398 = vdwg.mxu0
        %v1399 = vadd.f32 %v772, %v1394
        %v1400 = vld [vmem:[%s708] sm:$0x1]
        %v1401 = vld [vmem:[%s711] sm:$0x1]
        %v1402 = vsel %vm797, %v1399, 0.0
        %1403 = vadd.xlane.f32.xlu0 %v1402
        %v1404 = vpop.xlane.xlu0 %1403
        %v1405 = vrcp.pop 32.0
        %v1406 = vmul.f32 %v1404, %v1405
        %v1407 = vsub.f32 %v1399, %v1406
        %v1408 = vmul.f32 %v1407, %v1407
        %v1409 = vsel %vm797, %v1408, 0.0
        %1410 = vadd.xlane.f32.xlu0 %v1409
        %v1411 = vpop.xlane.xlu0 %1410
        %v1412 = vmul.f32 %v1411, %v1405
        %v1413 = vadd.f32 %v1412, 1e-12
        %v1414 = vrsqrt.pop %v1413
        %v1415 = vmul.f32 %v1407, %v1414
        %v1417 = vlaneseq
        %v1418 = vshrl.u32 %v1417, 7
        %v1419 = vsub.s32 0, %v1418
        %v1420 = vrot.slane %v1400, %v1419
        %v1422 = vmul.f32 %v1415, %v1420
        %v1424 = vlaneseq
        %v1425 = vshrl.u32 %v1424, 7
        %v1426 = vsub.s32 0, %v1425
        %v1427 = vrot.slane %v1401, %v1426
        %v1429 = vadd.f32 %v1422, %v1427
        %v1430 = vpack.c.bf16 %v1429, %v1429
        %v1431 = vld [vmem:[%s716] sm:$0xf]
        %v1432 = vld [vmem:[%s716 + $0x4] sm:$0xf]
        %v1433 = vld [vmem:[%s716 + $0x8] sm:$0xf]
        %v1434 = vld [vmem:[%s716 + $0xc] sm:$0xf]
        %v1435 = vld [vmem:[%s719] sm:$0x1]
        %v1437 = vlaneseq
        %v1438 = vshrl.u32 %v1437, 7
        %v1439 = vsub.s32 0, %v1438
        %v1440 = vrot.slane %v1435, %v1439
        %v1446 = vunpack.c.l.b16 %v1431
        %v1447 = vunpack.c.l.b16 %v1432
        %v1448 = vunpack.c.l.b16 %v1433
        %v1449 = vunpack.c.l.b16 %v1434
        %v1450 = vpack.c.b16 %v1447, %v1446
        %v1451 = vpack.c.b16 %v1449, %v1448
        %v1455 = vsel %vm797, %v1430, 0
        %1457 = vmatprep.subr.bf16.mxu0 0
        %1458 = vmatpush1.bf16.msra.mxu0 %v1450
        %1459 = vmatprep.subr.bf16.mxu0 0
        %1460 = vmatpush1.bf16.msra.mxu0 %v1451
        %1461 = vmatprep.subr.bf16.mxu0 0
        %1462 = vmatpush1.bf16.msra.mxu0 0
        %1463 = vmatprep.subr.bf16.mxu0 0
        %1464 = vmatpush1.bf16.msra.mxu0 0
        %1465 = vmatprep.subr.bf16.mxu0 0
        %1466 = vmatpush1.bf16.msra.mxu0 0
        %1467 = vmatprep.subr.bf16.mxu0 0
        %1468 = vmatpush1.bf16.msra.mxu0 0
        %1469 = vmatprep.subr.bf16.mxu0 0
        %1470 = vmatpush1.bf16.msra.mxu0 0
        %1471 = vmatprep.subr.bf16.mxu0 0
        %1472 = vmatpush1.bf16.msra.mxu0 0
        %1473 = vmatprep.subr.bf16.mxu0 0
        %1474 = vmatpush1.bf16.msra.mxu0 0
        %1475 = vmatprep.subr.bf16.mxu0 0
        %1476 = vmatpush1.bf16.msra.mxu0 0
        %1477 = vmatprep.subr.bf16.mxu0 0
        %1478 = vmatpush1.bf16.msra.mxu0 0
        %1479 = vmatprep.subr.bf16.mxu0 0
        %1480 = vmatpush1.bf16.msra.mxu0 0
        %1481 = vmatprep.subr.bf16.mxu0 0
        %1482 = vmatpush1.bf16.msra.mxu0 0
        %1483 = vmatprep.subr.bf16.mxu0 0
        %1484 = vmatpush1.bf16.msra.mxu0 0
        %1485 = vmatprep.subr.bf16.mxu0 0
        %1486 = vmatpush1.bf16.msra.mxu0 0
        %1487 = vmatprep.subr.bf16.mxu0 0
        %1488 = vmatpush1.bf16.msra.mxu0 0
        %1489 = vmatprep.mubr.bf16.mxu0 0
        %1490 = vmatmul.mubr.bf16.gmra.mrb[0].mxu0 %v1455
        %v1491 = vpop.f32.mrb[0].mxu0
        %v1492 = vadd.f32 %v1440, %v1491
        %v1493 = vpop.f32.mrb[0].mxu0
        %v1494 = vpop.f32.mrb[0].mxu0
        %v1495 = vpop.f32.mrb[0].mxu0
        %1496 = vdwg.mxu0
        %v1497 = vmul.f32 %v1492, %v1492
        %v1498 = vmul.f32 %v1492, %v1497
        %v1499 = vmul.f32 %v1498, 0.044715
        %v1500 = vadd.f32 %v1492, %v1499
        %v1501 = vmul.f32 %v1500, 0.7978846
        %v1502 = vtanh.pop %v1501
        %v1503 = vadd.f32 %v1502, 1.0
        %v1504 = vmul.f32 %v1503, 0.5
        %v1505 = vmul.f32 %v1492, %v1504
        %v1506 = vpack.c.bf16 %v1505, %v1505
        %v1507 = vld [vmem:[%s724] sm:$0xf]
        %v1508 = vld [vmem:[%s724 + $0x4] sm:$0xf]
        %v1509 = vld [vmem:[%s724 + $0x8] sm:$0xf]
        %v1510 = vld [vmem:[%s724 + $0xc] sm:$0xf]
        %v1511 = vld [vmem:[%s724 + $0x10] sm:$0xf]
        %v1512 = vld [vmem:[%s724 + $0x14] sm:$0xf]
        %v1513 = vld [vmem:[%s724 + $0x18] sm:$0xf]
        %v1514 = vld [vmem:[%s724 + $0x1c] sm:$0xf]
        %v1515 = vld [vmem:[%s724 + $0x20] sm:$0xf]
        %v1516 = vld [vmem:[%s724 + $0x24] sm:$0xf]
        %v1517 = vld [vmem:[%s724 + $0x28] sm:$0xf]
        %v1518 = vld [vmem:[%s724 + $0x2c] sm:$0xf]
        %v1519 = vld [vmem:[%s724 + $0x30] sm:$0xf]
        %v1520 = vld [vmem:[%s724 + $0x34] sm:$0xf]
        %v1521 = vld [vmem:[%s724 + $0x38] sm:$0xf]
        %v1522 = vld [vmem:[%s724 + $0x3c] sm:$0xf]
        %v1523 = vld [vmem:[%s727] sm:$0x1]
        %v1525 = vlaneseq
        %v1526 = vshrl.u32 %v1525, 7
        %v1527 = vsub.s32 0, %v1526
        %v1528 = vrot.slane %v1523, %v1527
        %v1546 = vunpack.c.l.b16 %v1507
        %v1547 = vunpack.c.l.b16 %v1508
        %v1548 = vunpack.c.l.b16 %v1509
        %v1549 = vunpack.c.l.b16 %v1510
        %v1550 = vunpack.c.l.b16 %v1511
        %v1551 = vunpack.c.l.b16 %v1512
        %v1552 = vunpack.c.l.b16 %v1513
        %v1553 = vunpack.c.l.b16 %v1514
        %v1554 = vunpack.c.l.b16 %v1515
        %v1555 = vunpack.c.l.b16 %v1516
        %v1556 = vunpack.c.l.b16 %v1517
        %v1557 = vunpack.c.l.b16 %v1518
        %v1558 = vunpack.c.l.b16 %v1519
        %v1559 = vunpack.c.l.b16 %v1520
        %v1560 = vunpack.c.l.b16 %v1521
        %v1561 = vunpack.c.l.b16 %v1522
        %v1562 = vpack.c.b16 %v1547, %v1546
        %v1563 = vpack.c.b16 %v1549, %v1548
        %v1564 = vpack.c.b16 %v1551, %v1550
        %v1565 = vpack.c.b16 %v1553, %v1552
        %v1566 = vpack.c.b16 %v1555, %v1554
        %v1567 = vpack.c.b16 %v1557, %v1556
        %v1568 = vpack.c.b16 %v1559, %v1558
        %v1569 = vpack.c.b16 %v1561, %v1560
        %1578 = vmatprep.subr.bf16.mxu0 0
        %1579 = vmatpush1.bf16.msra.mxu0 %v1562
        %1580 = vmatprep.subr.bf16.mxu0 0
        %1581 = vmatpush1.bf16.msra.mxu0 %v1563
        %1582 = vmatprep.subr.bf16.mxu0 0
        %1583 = vmatpush1.bf16.msra.mxu0 %v1564
        %1584 = vmatprep.subr.bf16.mxu0 0
        %1585 = vmatpush1.bf16.msra.mxu0 %v1565
        %1586 = vmatprep.subr.bf16.mxu0 0
        %1587 = vmatpush1.bf16.msra.mxu0 %v1566
        %1588 = vmatprep.subr.bf16.mxu0 0
        %1589 = vmatpush1.bf16.msra.mxu0 %v1567
        %1590 = vmatprep.subr.bf16.mxu0 0
        %1591 = vmatpush1.bf16.msra.mxu0 %v1568
        %1592 = vmatprep.subr.bf16.mxu0 0
        %1593 = vmatpush1.bf16.msra.mxu0 %v1569
        %1594 = vmatprep.subr.bf16.mxu0 0
        %1595 = vmatpush1.bf16.msra.mxu0 0
        %1596 = vmatprep.subr.bf16.mxu0 0
        %1597 = vmatpush1.bf16.msra.mxu0 0
        %1598 = vmatprep.subr.bf16.mxu0 0
        %1599 = vmatpush1.bf16.msra.mxu0 0
        %1600 = vmatprep.subr.bf16.mxu0 0
        %1601 = vmatpush1.bf16.msra.mxu0 0
        %1602 = vmatprep.subr.bf16.mxu0 0
        %1603 = vmatpush1.bf16.msra.mxu0 0
        %1604 = vmatprep.subr.bf16.mxu0 0
        %1605 = vmatpush1.bf16.msra.mxu0 0
        %1606 = vmatprep.subr.bf16.mxu0 0
        %1607 = vmatpush1.bf16.msra.mxu0 0
        %1608 = vmatprep.subr.bf16.mxu0 0
        %1609 = vmatpush1.bf16.msra.mxu0 0
        %1610 = vmatprep.mubr.bf16.mxu0 0
        %1611 = vmatmul.mubr.bf16.gmra.mrb[0].mxu0 %v1506
        %v1612 = vpop.f32.mrb[0].mxu0
        %v1613 = vadd.f32 %v1528, %v1612
        %v1614 = vpop.f32.mrb[0].mxu0
        %v1615 = vpop.f32.mrb[0].mxu0
        %v1616 = vpop.f32.mrb[0].mxu0
        %1617 = vdwg.mxu0
        %v1618 = vadd.f32 %v1429, %v1613
        %v1619 = vld [vmem:[%s730] sm:$0x1]
        %v1620 = vld [vmem:[%s733] sm:$0x1]
        %v1621 = vsel %vm797, %v1618, 0.0
        %1622 = vadd.xlane.f32.xlu0 %v1621
        %v1623 = vpop.xlane.xlu0 %1622
        %v1624 = vmul.f32 %v1623, %v1405
        %v1625 = vsub.f32 %v1618, %v1624
        %v1626 = vmul.f32 %v1625, %v1625
        %v1627 = vsel %vm797, %v1626, 0.0
        %1628 = vadd.xlane.f32.xlu0 %v1627
        %v1629 = vpop.xlane.xlu0 %1628
        %v1630 = vmul.f32 %v1629, %v1405
        %v1631 = vadd.f32 %v1630, 1e-12
        %v1632 = vrsqrt.pop %v1631
        %v1633 = vmul.f32 %v1625, %v1632
        %v1635 = vlaneseq
        %v1636 = vshrl.u32 %v1635, 7
        %v1637 = vsub.s32 0, %v1636
        %v1638 = vrot.slane %v1619, %v1637
        %v1640 = vmul.f32 %v1633, %v1638
        %v1642 = vlaneseq
        %v1643 = vshrl.u32 %v1642, 7
        %v1644 = vsub.s32 0, %v1643
        %v1645 = vrot.slane %v1620, %v1644
        %v1647 = vadd.f32 %v1640, %v1645
        %1648 = vst.msk [vmem:[#allocation2] sm:$0xff] %vm797, %v1647
        %p1649 = scmp.eq.s32.totalorder %s35, 1
        // Predicated region
        $region89: #{bert_forward.1} parent=83 // pred_check
          %p1650 = pneg %p1649
        $region90: #{bert_forward.1} parent=83 // pred_check_branch
          %1652 = sbr.rel (%p1650) target = $region92
        $region91: #{bert_forward.1} parent=83 // pred_region
          %v1653 = vmul.f32 %v1647, %v1647
          %vm1654 = vcmask 253952
          %v1655 = vsel %vm1654, %v1653, 0.0
          %1656 = vadd.xlane.f32.xlu0 %v1655
          %v1657 = vpop.xlane.xlu0 %1656
          %v1658 = vrsqrt.pop %v1657
          %v1659 = vmul.f32 %v1657, %v1658
          %vm1660 = vcmp.eq.f32.partialorder %v1657, inf
          %v1661 = vsel %vm1660, %v1657, %v1659
          %vm1662 = vcmp.eq.f32.partialorder %v1657, 0.0
          %v1663 = vand.u32 %v1657, 2147483648
          %v1664 = vsel %vm1662, %v1663, %v1661
          %v1665 = vmax.f32 %v1664, 1e-12
          %v1666 = vrcp.pop %v1665
          %v1667 = vmul.f32 %v1647, %v1666
          %1668 = vst.msk [vmem:[%s682] sm:$0x1] %vm1654, %v1667
        $region92: #{bert_forward.1} parent=83 // pred_fallthru
          _
        %s1669 = sand.u32 %s456, 1
        %s1670 = scalar_lea.sflag [#allocation6], %s1669
        %s1671 = sand.u32 %s456, 1
        %s1672 = scalar_lea.vmem [#allocation5], %s1671
        // Predicated region
        $region93: #{bert_forward.1} parent=83 // pred_check
          %p1673 = pneg %p466
        $region94: #{bert_forward.1} parent=83 // pred_check_branch
          %1675 = sbr.rel (%p1673) target = $region96
        $region95: #{bert_forward.1} parent=83 // pred_region
          %s1677 = ssub.s32 16, 16
          %1678 = vsyncadd %s1670, %s1677
          %s1679 = smul.addr %s34, 16
          %s1680 = scalar_lea.hbm %s16, %s1679
          %s1682 = sshll.u32 %s1672, 4
          %s1683 = int_to_ptr.vmem [resolvable:$true] %s1682
          %1685 = dma.vmem_to_hbm [thread:$0]  %s1683, 16, %s1680, %s1670
        $region96: #{bert_forward.1} parent=83 // pred_fallthru
          _
      $region84: #{bert_forward.1} parent=5 // pred_fallthru
        _
      %p1686 = scmp.le.s32.totalorder 2, %s25
      // Predicated region
      $region97: #{bert_forward.1} parent=5 // pred_check
        %p1687 = pneg %p1686
      $region98: #{bert_forward.1} parent=5 // pred_check_branch
        %1689 = sbr.rel (%p1687) target = $region100
      $region99: #{bert_forward.1} parent=5 // pred_region
        %s1690 = ssub.s32 %s25, 2
        // Predicated region
        $region101: #{bert_forward.1} parent=99 // pred_check
          %p1691 = pneg %p472
        $region102: #{bert_forward.1} parent=99 // pred_check_branch
          %1693 = sbr.rel (%p1691) target = $region104
        $region103: #{bert_forward.1} parent=99 // pred_region
          %s1694 = sand.u32 %s457, 1
          %s1695 = scalar_lea.sflag [#allocation6], %s1694
          %s1696 = sand.u32 %s457, 1
          %s1697 = scalar_lea.vmem [#allocation5], %s1696
          %1698 = dma.done %s1695, 16
        $region104: #{bert_forward.1} parent=99 // pred_fallthru
          _
      $region100: #{bert_forward.1} parent=5 // pred_fallthru
        _
    $region6: #{bert_forward.1} parent=1 // loop_footer
      %s29 = sadd.s32 1, %s25
    $region7: #{bert_forward.1} parent=1 // loop_footer_branch
      %24 = sbr.rel target = $region3
    $region8: #{bert_forward.1} parent=1 // loop_exit
      _
    %1699 = vsyncpa [#allocation6], 1
    %s1700 = scalar_lea.sflag [#allocation6], 1
    %1701 = vsyncpa %s1700, 1

</llo_original>
